<compile_context>
chip_gen: v6e
topology: v6e:2x2x1
jax: 0.10.0
libtpu: 0.0.40
codegen_flags: <defaults>
</compile_context>

<pallas_src>
import functools

import jax
import jax.numpy as jnp
from jax import lax
from jax.experimental import pallas as pl
from jax.experimental.pallas import tpu as pltpu

LN_EPS = 1e-5      # torch.nn.LayerNorm default
TM_MAX = 512       # large row tiles amortize the ~0.35us per-grid-step overhead
TF_MAX = 1024      # F-chunk cap: bounds the live (TM, TF) f32 intermediate


def _round_up(a, b):
    return ((a + b - 1) // b) * b


def _sublane_pack(dtype):
    # rows per native sublane tile: 8 for f32, 16 for bf16, 32 for int8/fp8
    return max(8, 32 // jnp.dtype(dtype).itemsize)


def _pick_row_tile(m, dtype):
    pack = _sublane_pack(dtype)
    if m >= 2 * TM_MAX:
        return TM_MAX                      # multiple of 256 -> full MXU-height tiles
    if m >= 2 * 256:
        return 256
    # Small problems: still give the row grid >= 2 steps so the "parallel"
    # axis can be sharded across v7x's two TensorCores.
    return _round_up(max((m + 1) // 2, pack), pack)


def _pick_f_chunk(f):
    return min(_round_up(f, 128), TF_MAX)


def _vmem_limit_bytes(tm, tf, d_pad, in_itemsize, out_itemsize):
    x_tiles = 2 * tm * d_pad * in_itemsize          # double-buffered x tile
    o_tiles = 2 * tm * d_pad * out_itemsize         # double-buffered out tile
    w1_bufs = 2 * tf * d_pad * in_itemsize          # double-buffered W1 chunk
    w2_bufs = 2 * tf * d_pad * in_itemsize          # double-buffered W2 chunk
    b1_bufs = 2 * tf * 4
    params = 3 * d_pad * 4                          # b2 / gamma / beta (single-buffered)
    acc = tm * d_pad * 4                            # f32 accumulator scratch
    h_live = tm * tf * 4                            # live (TM, TF) f32 intermediate
    est = x_tiles + o_tiles + w1_bufs + w2_bufs + b1_bufs + params + acc + h_live
    est = int(est * 1.25) + (4 << 20)               # headroom for Mosaic internal scratch
    return max(min(est, 56 << 20), 8 << 20)         # cap well below v7x's 64 MiB physical


def ffn_kernel(x_ref, w1_ref, b1_ref, w2_ref, b2_ref, gamma_ref, beta_ref,
               o_ref, acc_ref, *, d_true):
    f = pl.program_id(1)
    nf = pl.num_programs(1)

    @pl.when(f == 0)
    def _():
        acc_ref[...] = jnp.zeros_like(acc_ref)

    x = x_ref[...]                                          # (TM, D_pad), native dtype

    # h = relu(x @ W1_chunk^T + b1_chunk); W1 chunk is (TF, D) nn.Linear layout,
    # contraction on D set via dot_general (no transpose materialized).
    h = lax.dot_general(x, w1_ref[...], (((1,), (1,)), ((), ())),
                        preferred_element_type=jnp.float32)  # (TM, TF) f32
    h = jnp.maximum(h + b1_ref[...], 0.0)

    # y_partial = h @ W2_chunk^T; W2 chunk is (D, TF) nn.Linear layout.
    acc_ref[...] += lax.dot_general(h.astype(w2_ref.dtype), w2_ref[...],
                                    (((1,), (1,)), ((), ())),
                                    preferred_element_type=jnp.float32)  # (TM, D_pad)

    @pl.when(f == nf - 1)
    def _():
        # TODO(synk): nn.Dropout(0.5) is an identity here (inference / eval mode).
        y = acc_ref[...] + b2_ref[...] + x.astype(jnp.float32)   # bias + residual

        # LayerNorm over the TRUE model_dim (padded columns are zero, so sums
        # are unaffected); biased variance, matching torch.
        inv_d = 1.0 / d_true
        mean = jnp.sum(y, axis=-1, keepdims=True) * inv_d
        var = jnp.maximum(jnp.sum(y * y, axis=-1, keepdims=True) * inv_d - mean * mean, 0.0)
        out = (y - mean) * lax.rsqrt(var + LN_EPS) * gamma_ref[...] + beta_ref[...]
        o_ref[...] = out.astype(o_ref.dtype)


def positional_wise_ffn(x, w1, b1, w2, b2, gamma, beta):
    """x: (B, S, D).  Params in nn.Linear / nn.LayerNorm layout:
    w1: (F, D), b1: (F,), w2: (D, F), b2: (D,), gamma/beta: (D,)."""
    B, S, D = x.shape
    F = w1.shape[0]
    M = B * S
    compute_dtype = x.dtype
    in_itemsize = jnp.dtype(compute_dtype).itemsize

    TM = _pick_row_tile(M, compute_dtype)
    M_pad = _round_up(M, TM)
    TF = _pick_f_chunk(F)
    F_pad = _round_up(F, TF)
    D_pad = _round_up(D, 128)            # lane-dense last dim -> unmasked stores

    x2d = x.reshape(M, D)
    if M_pad != M or D_pad != D:
        # Padded rows are all-zero: LayerNorm gives finite rsqrt(eps)*0 rows
        # which are sliced off below (no NaN risk).
        x2d = jnp.pad(x2d, ((0, M_pad - M), (0, D_pad - D)))

    # Weights keep nn.Linear layout (no transpose); only a dtype policy cast.
    w1_p = w1.astype(compute_dtype)
    w2_p = w2.astype(compute_dtype)
    if F_pad != F or D_pad != D:
        w1_p = jnp.pad(w1_p, ((0, F_pad - F), (0, D_pad - D)))
        w2_p = jnp.pad(w2_p, ((0, D_pad - D), (0, F_pad - F)))
    b1_r = b1.astype(jnp.float32).reshape(1, F)
    b2_r = b2.astype(jnp.float32).reshape(1, D)
    gamma_r = gamma.astype(jnp.float32).reshape(1, D)
    beta_r = beta.astype(jnp.float32).reshape(1, D)
    if F_pad != F:
        b1_r = jnp.pad(b1_r, ((0, 0), (0, F_pad - F)))
    if D_pad != D:
        b2_r = jnp.pad(b2_r, ((0, 0), (0, D_pad - D)))
        gamma_r = jnp.pad(gamma_r, ((0, 0), (0, D_pad - D)))
        beta_r = jnp.pad(beta_r, ((0, 0), (0, D_pad - D)))

    grid = (M_pad // TM, F_pad // TF)
    n_row_tiles, n_f_chunks = grid

    weight_passes = n_row_tiles if n_f_chunks > 1 else 1
    cost = pl.CostEstimate(
        flops=2 * 2 * M_pad * D_pad * F_pad,                  # two matmuls
        transcendentals=M_pad,                                # one rsqrt per row
        bytes_accessed=(2 * M_pad * D_pad * in_itemsize       # x in + out
                        + 2 * D_pad * F_pad * in_itemsize * weight_passes
                        + (F_pad + 3 * D_pad) * 4),
    )

    vmem_limit = _vmem_limit_bytes(TM, TF, D_pad, in_itemsize, in_itemsize)
    kernel = functools.partial(ffn_kernel, d_true=float(D))

    def _call(single_buffer_params):
        def param_spec():
            if single_buffer_params:
                # Constant block index -> one resident buffer is enough.
                return pl.BlockSpec((1, D_pad), lambda i, f: (0, 0),
                                    pipeline_mode=pl.Buffered(buffer_count=1))
            return pl.BlockSpec((1, D_pad), lambda i, f: (0, 0))

        in_specs = [
            pl.BlockSpec((TM, D_pad), lambda i, f: (i, 0)),   # x tile (pipelined; fixed across f)
            pl.BlockSpec((TF, D_pad), lambda i, f: (f, 0)),   # W1 chunk, (F,D) layout
            pl.BlockSpec((1, TF), lambda i, f: (0, f)),       # b1 chunk
            pl.BlockSpec((D_pad, TF), lambda i, f: (0, f)),   # W2 chunk, (D,F) layout
            param_spec(),                                     # b2
            param_spec(),                                     # gamma
            param_spec(),                                     # beta
        ]
        return pl.pallas_call(
            kernel,
            out_shape=jax.ShapeDtypeStruct((M_pad, D_pad), x.dtype),
            grid=grid,
            in_specs=in_specs,
            out_specs=pl.BlockSpec((TM, D_pad), lambda i, f: (i, 0)),
            scratch_shapes=[pltpu.VMEM((TM, D_pad), jnp.float32)],
            compiler_params=pltpu.CompilerParams(
                dimension_semantics=("parallel", "arbitrary"),
                vmem_limit_bytes=vmem_limit,
            ),
            cost_estimate=cost,
        )(x2d, w1_p, b1_r, w2_p, b2_r, gamma_r, beta_r)

    try:
        out2d = _call(True)
    except Exception:
        # Fallback: identical kernel with default double-buffered params
        # (only taken if Buffered(1) is rejected by this Pallas version).
        out2d = _call(False)

    if M_pad != M or D_pad != D:
        out2d = out2d[:M, :D]
    return out2d.reshape(B, S, D)


def reference(x, w1, b1, w2, b2, gamma, beta):
    h = jnp.maximum(jnp.einsum("bsd,fd->bsf", x, w1) + b1, 0.0)
    y = jnp.einsum("bsf,df->bsd", h, w2) + b2
    y = y + x
    mean = jnp.mean(y, axis=-1, keepdims=True)
    var = jnp.mean((y - mean) ** 2, axis=-1, keepdims=True)
    return (y - mean) * lax.rsqrt(var + LN_EPS) * gamma + beta


if __name__ == "__main__":
    def make_case(key, B, S, D, F, dtype=jnp.float32):
        kx, k1, kb1, k2, kb2 = jax.random.split(key, 5)
        x = jax.random.normal(kx, (B, S, D), dtype=dtype)
        w1 = jax.random.normal(k1, (F, D), dtype=dtype) * 0.05
        b1 = jax.random.normal(kb1, (F,), dtype=dtype) * 0.05
        w2 = jax.random.normal(k2, (D, F), dtype=dtype) * 0.05
        b2 = jax.random.normal(kb2, (D,), dtype=dtype) * 0.05
        gamma = jnp.ones((D,), dtype=dtype)
        beta = jnp.zeros((D,), dtype=dtype)
        return (x, w1, b1, w2, b2, gamma, beta)

    key = jax.random.PRNGKey(0)
    k_a, k_b = jax.random.split(key)

    # Case A: small shape -> single F chunk, two row tiles.
    args_a = make_case(k_a, 2, 8, 128, 256)
    out_a = jax.block_until_ready(positional_wise_ffn(*args_a))
    ref_a = reference(*args_a)
    assert out_a.shape == args_a[0].shape
    assert jnp.allclose(out_a, ref_a, atol=1e-4, rtol=1e-4), \
        float(jnp.max(jnp.abs(out_a - ref_a)))

    # Case B: module defaults (model_dim=256, ffn_dim=2048) -> two F chunks,
    # exercising the accumulator init / finalize path.
    args_b = make_case(k_b, 2, 8, 256, 2048)
    out_b = jax.block_until_ready(positional_wise_ffn(*args_b))
    ref_b = reference(*args_b)
    assert out_b.shape == args_b[0].shape
    assert jnp.allclose(out_b, ref_b, atol=2e-4, rtol=2e-4), \
        float(jnp.max(jnp.abs(out_b - ref_b)))

    print("KERNEL_OK")
</pallas_src>

<mosaic_0001>
module attributes {stable_mosaic.version = 11 : i64} {
  func.func @ffn_kernel(%arg0: i32, %arg1: i32, %arg2: memref<8x128xf32, #tpu.memory_space<vmem>>, %arg3: memref<256x128xf32, #tpu.memory_space<vmem>>, %arg4: memref<1x256xf32, #tpu.memory_space<vmem>>, %arg5: memref<128x256xf32, #tpu.memory_space<vmem>>, %arg6: memref<1x128xf32, #tpu.memory_space<vmem>>, %arg7: memref<1x128xf32, #tpu.memory_space<vmem>>, %arg8: memref<1x128xf32, #tpu.memory_space<vmem>>, %arg9: memref<8x128xf32, #tpu.memory_space<vmem>>, %arg10: memref<8x128xf32, #tpu.memory_space<vmem>>) attributes {dimension_semantics = [#tpu.dimension_semantics<parallel>, #tpu.dimension_semantics<arbitrary>], iteration_bounds = array<i64: 2, 1>, scalar_prefetch = 0 : i64, scratch_operands = 1 : i64, tpu.core_type = #tpu.core_type<tc>, window_params = [{transform_indices = @transform_0, window_bounds = array<i64: 8, 128>}, {transform_indices = @transform_1, window_bounds = array<i64: 256, 128>}, {transform_indices = @transform_2, window_bounds = array<i64: 1, 256>}, {transform_indices = @transform_3, window_bounds = array<i64: 128, 256>}, {pipeline_mode = #tpu.pipeline_mode<synchronous>, transform_indices = @transform_4, window_bounds = array<i64: 1, 128>}, {pipeline_mode = #tpu.pipeline_mode<synchronous>, transform_indices = @transform_5, window_bounds = array<i64: 1, 128>}, {pipeline_mode = #tpu.pipeline_mode<synchronous>, transform_indices = @transform_6, window_bounds = array<i64: 1, 128>}, {transform_indices = @transform_7, window_bounds = array<i64: 8, 128>}]} {
    %c0_i32 = arith.constant 0 : i32
    %0 = arith.cmpi eq, %arg1, %c0_i32 : i32
    %1 = arith.extui %0 : i1 to i32
    %c0_i32_0 = arith.constant 0 : i32
    %2 = arith.cmpi ne, %1, %c0_i32_0 : i32
    scf.if %2 {
      %cst_16 = arith.constant 0.000000e+00 : f32
      %19 = vector.broadcast %cst_16 : f32 to vector<8x128xf32>
      %c0_17 = arith.constant 0 : index
      %c0_18 = arith.constant 0 : index
      %20 = vector.load %arg10[%c0_17, %c0_18] : memref<8x128xf32, #tpu.memory_space<vmem>>, vector<8x128xf32>
      tpu.vector_store %arg10[%c0_17, %c0_18], %19 {strides = array<i32>} : memref<8x128xf32, #tpu.memory_space<vmem>>, vector<8x128xf32>,
    } else {
    }
    %c0 = arith.constant 0 : index
    %c0_1 = arith.constant 0 : index
    %3 = vector.load %arg2[%c0, %c0_1] : memref<8x128xf32, #tpu.memory_space<vmem>>, vector<8x128xf32>
    %c0_2 = arith.constant 0 : index
    %c0_3 = arith.constant 0 : index
    %4 = vector.load %arg3[%c0_2, %c0_3] : memref<256x128xf32, #tpu.memory_space<vmem>>, vector<256x128xf32>
    %cst = arith.constant dense<0.000000e+00> : vector<8x256xf32>
    %5 = tpu.matmul %3, %4, %cst {dimension_numbers = #tpu.dot_dimension_numbers<[1], [1], [0], [0], [0, 0, 1, 0], [], []>} : vector<8x128xf32>, vector<256x128xf32>, vector<8x256xf32> -> vector<8x256xf32>
    %c0_4 = arith.constant 0 : index
    %c0_5 = arith.constant 0 : index
    %6 = vector.load %arg4[%c0_4, %c0_5] : memref<1x256xf32, #tpu.memory_space<vmem>>, vector<1x256xf32>
    %7 = vector.broadcast %6 : vector<1x256xf32> to vector<8x256xf32>
    %8 = arith.addf %5, %7 : vector<8x256xf32>
    %cst_6 = arith.constant 0.000000e+00 : f32
    %9 = vector.broadcast %cst_6 : f32 to vector<8x256xf32>
    %10 = arith.maximumf %8, %9 : vector<8x256xf32>
    %c0_7 = arith.constant 0 : index
    %c0_8 = arith.constant 0 : index
    %11 = vector.load %arg10[%c0_7, %c0_8] : memref<8x128xf32, #tpu.memory_space<vmem>>, vector<8x128xf32>
    %c0_9 = arith.constant 0 : index
    %c0_10 = arith.constant 0 : index
    %12 = vector.load %arg5[%c0_9, %c0_10] : memref<128x256xf32, #tpu.memory_space<vmem>>, vector<128x256xf32>
    %cst_11 = arith.constant dense<0.000000e+00> : vector<8x128xf32>
    %13 = tpu.matmul %10, %12, %cst_11 {dimension_numbers = #tpu.dot_dimension_numbers<[1], [1], [0], [0], [0, 0, 1, 0], [], []>} : vector<8x256xf32>, vector<128x256xf32>, vector<8x128xf32> -> vector<8x128xf32>
    %14 = arith.addf %11, %13 : vector<8x128xf32>
    %c0_12 = arith.constant 0 : index
    %c0_13 = arith.constant 0 : index
    %15 = vector.load %arg10[%c0_12, %c0_13] : memref<8x128xf32, #tpu.memory_space<vmem>>, vector<8x128xf32>
    tpu.vector_store %arg10[%c0_12, %c0_13], %14 {strides = array<i32>} : memref<8x128xf32, #tpu.memory_space<vmem>>, vector<8x128xf32>,
    %c0_i32_14 = arith.constant 0 : i32
    %16 = arith.cmpi eq, %arg1, %c0_i32_14 : i32
    %17 = arith.extui %16 : i1 to i32
    %c0_i32_15 = arith.constant 0 : i32
    %18 = arith.cmpi ne, %17, %c0_i32_15 : i32
    scf.if %18 {
      %c0_16 = arith.constant 0 : index
      %c0_17 = arith.constant 0 : index
      %19 = vector.load %arg10[%c0_16, %c0_17] : memref<8x128xf32, #tpu.memory_space<vmem>>, vector<8x128xf32>
      %c0_18 = arith.constant 0 : index
      %c0_19 = arith.constant 0 : index
      %20 = vector.load %arg6[%c0_18, %c0_19] : memref<1x128xf32, #tpu.memory_space<vmem>>, vector<1x128xf32>
      %21 = vector.broadcast %20 : vector<1x128xf32> to vector<8x128xf32>
      %22 = arith.addf %19, %21 : vector<8x128xf32>
      %23 = arith.addf %22, %3 : vector<8x128xf32>
      %cst_20 = arith.constant dense<0.000000e+00> : vector<8xf32>
      %24 = vector.multi_reduction <add>, %23, %cst_20 [1] : vector<8x128xf32> to vector<8xf32>
      %25 = vector.shape_cast %24 : vector<8xf32> to vector<8x1xf32>
      %cst_21 = arith.constant 7.812500e-03 : f32
      %26 = vector.broadcast %cst_21 : f32 to vector<8x1xf32>
      %27 = arith.mulf %25, %26 : vector<8x1xf32>
      %28 = arith.mulf %23, %23 : vector<8x128xf32>
      %cst_22 = arith.constant dense<0.000000e+00> : vector<8xf32>
      %29 = vector.multi_reduction <add>, %28, %cst_22 [1] : vector<8x128xf32> to vector<8xf32>
      %30 = vector.shape_cast %29 : vector<8xf32> to vector<8x1xf32>
      %cst_23 = arith.constant 7.812500e-03 : f32
      %31 = vector.broadcast %cst_23 : f32 to vector<8x1xf32>
      %32 = arith.mulf %30, %31 : vector<8x1xf32>
      %33 = arith.mulf %27, %27 : vector<8x1xf32>
      %34 = arith.subf %32, %33 : vector<8x1xf32>
      %cst_24 = arith.constant 0.000000e+00 : f32
      %35 = vector.broadcast %cst_24 : f32 to vector<8x1xf32>
      %36 = arith.maximumf %34, %35 : vector<8x1xf32>
      %37 = vector.broadcast %27 : vector<8x1xf32> to vector<8x128xf32>
      %38 = arith.subf %23, %37 : vector<8x128xf32>
      %cst_25 = arith.constant 9.99999974E-6 : f32
      %39 = vector.broadcast %cst_25 : f32 to vector<8x1xf32>
      %40 = arith.addf %36, %39 : vector<8x1xf32>
      %41 = math.rsqrt %40 : vector<8x1xf32>
      %42 = vector.broadcast %41 : vector<8x1xf32> to vector<8x128xf32>
      %43 = arith.mulf %38, %42 : vector<8x128xf32>
      %c0_26 = arith.constant 0 : index
      %c0_27 = arith.constant 0 : index
      %44 = vector.load %arg7[%c0_26, %c0_27] : memref<1x128xf32, #tpu.memory_space<vmem>>, vector<1x128xf32>
      %45 = vector.broadcast %44 : vector<1x128xf32> to vector<8x128xf32>
      %46 = arith.mulf %43, %45 : vector<8x128xf32>
      %c0_28 = arith.constant 0 : index
      %c0_29 = arith.constant 0 : index
      %47 = vector.load %arg8[%c0_28, %c0_29] : memref<1x128xf32, #tpu.memory_space<vmem>>, vector<1x128xf32>
      %48 = vector.broadcast %47 : vector<1x128xf32> to vector<8x128xf32>
      %49 = arith.addf %46, %48 : vector<8x128xf32>
      %c0_30 = arith.constant 0 : index
      %c0_31 = arith.constant 0 : index
      %50 = vector.load %arg9[%c0_30, %c0_31] : memref<8x128xf32, #tpu.memory_space<vmem>>, vector<8x128xf32>
      tpu.vector_store %arg9[%c0_30, %c0_31], %49 {strides = array<i32>} : memref<8x128xf32, #tpu.memory_space<vmem>>, vector<8x128xf32>,
    } else {
    }
    return
  }
  func.func @transform_0(%arg0: i32, %arg1: i32) -> (i32, i32) {
    %c0_i32 = arith.constant 0 : i32
    %c0_i32_0 = arith.constant 0 : i32
    return %arg0, %c0_i32 : i32, i32
  }
  func.func @transform_1(%arg0: i32, %arg1: i32) -> (i32, i32) {
    %c0_i32 = arith.constant 0 : i32
    %c0_i32_0 = arith.constant 0 : i32
    return %arg1, %c0_i32 : i32, i32
  }
  func.func @transform_2(%arg0: i32, %arg1: i32) -> (i32, i32) {
    %c0_i32 = arith.constant 0 : i32
    %c0_i32_0 = arith.constant 0 : i32
    return %c0_i32, %arg1 : i32, i32
  }
  func.func @transform_3(%arg0: i32, %arg1: i32) -> (i32, i32) {
    %c0_i32 = arith.constant 0 : i32
    %c0_i32_0 = arith.constant 0 : i32
    return %c0_i32, %arg1 : i32, i32
  }
  func.func @transform_4(%arg0: i32, %arg1: i32) -> (i32, i32) {
    %c0_i32 = arith.constant 0 : i32
    %c0_i32_0 = arith.constant 0 : i32
    %c0_i32_1 = arith.constant 0 : i32
    return %c0_i32, %c0_i32_0 : i32, i32
  }
  func.func @transform_5(%arg0: i32, %arg1: i32) -> (i32, i32) {
    %c0_i32 = arith.constant 0 : i32
    %c0_i32_0 = arith.constant 0 : i32
    %c0_i32_1 = arith.constant 0 : i32
    return %c0_i32, %c0_i32_0 : i32, i32
  }
  func.func @transform_6(%arg0: i32, %arg1: i32) -> (i32, i32) {
    %c0_i32 = arith.constant 0 : i32
    %c0_i32_0 = arith.constant 0 : i32
    %c0_i32_1 = arith.constant 0 : i32
    return %c0_i32, %c0_i32_0 : i32, i32
  }
  func.func @transform_7(%arg0: i32, %arg1: i32) -> (i32, i32) {
    %c0_i32 = arith.constant 0 : i32
    %c0_i32_0 = arith.constant 0 : i32
    return %arg0, %c0_i32 : i32, i32
  }
}

module attributes {stable_mosaic.version = 11 : i64} {
  func.func @ffn_kernel(%arg0: i32, %arg1: i32, %arg2: memref<8x128xf32, #tpu.memory_space<vmem>>, %arg3: memref<256x128xf32, #tpu.memory_space<vmem>>, %arg4: memref<1x256xf32, #tpu.memory_space<vmem>>, %arg5: memref<128x256xf32, #tpu.memory_space<vmem>>, %arg6: memref<1x128xf32, #tpu.memory_space<vmem>>, %arg7: memref<1x128xf32, #tpu.memory_space<vmem>>, %arg8: memref<1x128xf32, #tpu.memory_space<vmem>>, %arg9: memref<8x128xf32, #tpu.memory_space<vmem>>, %arg10: memref<8x128xf32, #tpu.memory_space<vmem>>) attributes {dimension_semantics = [#tpu.dimension_semantics<parallel>, #tpu.dimension_semantics<arbitrary>], iteration_bounds = array<i64: 2, 1>, scalar_prefetch = 0 : i64, scratch_operands = 1 : i64, tpu.core_type = #tpu.core_type<tc>, window_params = [{transform_indices = @transform_0, window_bounds = array<i64: 8, 128>}, {transform_indices = @transform_1, window_bounds = array<i64: 256, 128>}, {transform_indices = @transform_2, window_bounds = array<i64: 1, 256>}, {transform_indices = @transform_3, window_bounds = array<i64: 128, 256>}, {pipeline_mode = #tpu.pipeline_mode<synchronous>, transform_indices = @transform_4, window_bounds = array<i64: 1, 128>}, {pipeline_mode = #tpu.pipeline_mode<synchronous>, transform_indices = @transform_5, window_bounds = array<i64: 1, 128>}, {pipeline_mode = #tpu.pipeline_mode<synchronous>, transform_indices = @transform_6, window_bounds = array<i64: 1, 128>}, {transform_indices = @transform_7, window_bounds = array<i64: 8, 128>}]} {
    %c0_i32 = arith.constant 0 : i32
    %0 = arith.cmpi eq, %arg1, %c0_i32 : i32
    %1 = arith.extui %0 : i1 to i32
    %c0_i32_0 = arith.constant 0 : i32
    %2 = arith.cmpi ne, %1, %c0_i32_0 : i32
    scf.if %2 {
      %cst_16 = arith.constant 0.000000e+00 : f32
      %19 = vector.broadcast %cst_16 : f32 to vector<8x128xf32>
      %c0_17 = arith.constant 0 : index
      %c0_18 = arith.constant 0 : index
      %20 = vector.load %arg10[%c0_17, %c0_18] : memref<8x128xf32, #tpu.memory_space<vmem>>, vector<8x128xf32>
      tpu.vector_store %arg10[%c0_17, %c0_18], %19 {strides = array<i32>} : memref<8x128xf32, #tpu.memory_space<vmem>>, vector<8x128xf32>,
    } else {
    }
    %c0 = arith.constant 0 : index
    %c0_1 = arith.constant 0 : index
    %3 = vector.load %arg2[%c0, %c0_1] : memref<8x128xf32, #tpu.memory_space<vmem>>, vector<8x128xf32>
    %c0_2 = arith.constant 0 : index
    %c0_3 = arith.constant 0 : index
    %4 = vector.load %arg3[%c0_2, %c0_3] : memref<256x128xf32, #tpu.memory_space<vmem>>, vector<256x128xf32>
    %cst = arith.constant dense<0.000000e+00> : vector<8x256xf32>
    %5 = tpu.matmul %3, %4, %cst {dimension_numbers = #tpu.dot_dimension_numbers<[1], [1], [0], [0], [0, 0, 1, 0], [], []>} : vector<8x128xf32>, vector<256x128xf32>, vector<8x256xf32> -> vector<8x256xf32>
    %c0_4 = arith.constant 0 : index
    %c0_5 = arith.constant 0 : index
    %6 = vector.load %arg4[%c0_4, %c0_5] : memref<1x256xf32, #tpu.memory_space<vmem>>, vector<1x256xf32>
    %7 = vector.broadcast %6 : vector<1x256xf32> to vector<8x256xf32>
    %8 = arith.addf %5, %7 : vector<8x256xf32>
    %cst_6 = arith.constant 0.000000e+00 : f32
    %9 = vector.broadcast %cst_6 : f32 to vector<8x256xf32>
    %10 = arith.maximumf %8, %9 : vector<8x256xf32>
    %c0_7 = arith.constant 0 : index
    %c0_8 = arith.constant 0 : index
    %11 = vector.load %arg10[%c0_7, %c0_8] : memref<8x128xf32, #tpu.memory_space<vmem>>, vector<8x128xf32>
    %c0_9 = arith.constant 0 : index
    %c0_10 = arith.constant 0 : index
    %12 = vector.load %arg5[%c0_9, %c0_10] : memref<128x256xf32, #tpu.memory_space<vmem>>, vector<128x256xf32>
    %cst_11 = arith.constant dense<0.000000e+00> : vector<8x128xf32>
    %13 = tpu.matmul %10, %12, %cst_11 {dimension_numbers = #tpu.dot_dimension_numbers<[1], [1], [0], [0], [0, 0, 1, 0], [], []>} : vector<8x256xf32>, vector<128x256xf32>, vector<8x128xf32> -> vector<8x128xf32>
    %14 = arith.addf %11, %13 : vector<8x128xf32>
    %c0_12 = arith.constant 0 : index
    %c0_13 = arith.constant 0 : index
    %15 = vector.load %arg10[%c0_12, %c0_13] : memref<8x128xf32, #tpu.memory_space<vmem>>, vector<8x128xf32>
    tpu.vector_store %arg10[%c0_12, %c0_13], %14 {strides = array<i32>} : memref<8x128xf32, #tpu.memory_space<vmem>>, vector<8x128xf32>,
    %c0_i32_14 = arith.constant 0 : i32
    %16 = arith.cmpi eq, %arg1, %c0_i32_14 : i32
    %17 = arith.extui %16 : i1 to i32
    %c0_i32_15 = arith.constant 0 : i32
    %18 = arith.cmpi ne, %17, %c0_i32_15 : i32
    scf.if %18 {
      %c0_16 = arith.constant 0 : index
      %c0_17 = arith.constant 0 : index
      %19 = vector.load %arg10[%c0_16, %c0_17] : memref<8x128xf32, #tpu.memory_space<vmem>>, vector<8x128xf32>
      %c0_18 = arith.constant 0 : index
      %c0_19 = arith.constant 0 : index
      %20 = vector.load %arg6[%c0_18, %c0_19] : memref<1x128xf32, #tpu.memory_space<vmem>>, vector<1x128xf32>
      %21 = vector.broadcast %20 : vector<1x128xf32> to vector<8x128xf32>
      %22 = arith.addf %19, %21 : vector<8x128xf32>
      %23 = arith.addf %22, %3 : vector<8x128xf32>
      %cst_20 = arith.constant dense<0.000000e+00> : vector<8xf32>
      %24 = vector.multi_reduction <add>, %23, %cst_20 [1] : vector<8x128xf32> to vector<8xf32>
      %25 = vector.shape_cast %24 : vector<8xf32> to vector<8x1xf32>
      %cst_21 = arith.constant 7.812500e-03 : f32
      %26 = vector.broadcast %cst_21 : f32 to vector<8x1xf32>
      %27 = arith.mulf %25, %26 : vector<8x1xf32>
      %28 = arith.mulf %23, %23 : vector<8x128xf32>
      %cst_22 = arith.constant dense<0.000000e+00> : vector<8xf32>
      %29 = vector.multi_reduction <add>, %28, %cst_22 [1] : vector<8x128xf32> to vector<8xf32>
      %30 = vector.shape_cast %29 : vector<8xf32> to vector<8x1xf32>
      %cst_23 = arith.constant 7.812500e-03 : f32
      %31 = vector.broadcast %cst_23 : f32 to vector<8x1xf32>
      %32 = arith.mulf %30, %31 : vector<8x1xf32>
      %33 = arith.mulf %27, %27 : vector<8x1xf32>
      %34 = arith.subf %32, %33 : vector<8x1xf32>
      %cst_24 = arith.constant 0.000000e+00 : f32
      %35 = vector.broadcast %cst_24 : f32 to vector<8x1xf32>
      %36 = arith.maximumf %34, %35 : vector<8x1xf32>
      %37 = vector.broadcast %27 : vector<8x1xf32> to vector<8x128xf32>
      %38 = arith.subf %23, %37 : vector<8x128xf32>
      %cst_25 = arith.constant 9.99999974E-6 : f32
      %39 = vector.broadcast %cst_25 : f32 to vector<8x1xf32>
      %40 = arith.addf %36, %39 : vector<8x1xf32>
      %41 = math.rsqrt %40 : vector<8x1xf32>
      %42 = vector.broadcast %41 : vector<8x1xf32> to vector<8x128xf32>
      %43 = arith.mulf %38, %42 : vector<8x128xf32>
      %c0_26 = arith.constant 0 : index
      %c0_27 = arith.constant 0 : index
      %44 = vector.load %arg7[%c0_26, %c0_27] : memref<1x128xf32, #tpu.memory_space<vmem>>, vector<1x128xf32>
      %45 = vector.broadcast %44 : vector<1x128xf32> to vector<8x128xf32>
      %46 = arith.mulf %43, %45 : vector<8x128xf32>
      %c0_28 = arith.constant 0 : index
      %c0_29 = arith.constant 0 : index
      %47 = vector.load %arg8[%c0_28, %c0_29] : memref<1x128xf32, #tpu.memory_space<vmem>>, vector<1x128xf32>
      %48 = vector.broadcast %47 : vector<1x128xf32> to vector<8x128xf32>
      %49 = arith.addf %46, %48 : vector<8x128xf32>
      %c0_30 = arith.constant 0 : index
      %c0_31 = arith.constant 0 : index
      %50 = vector.load %arg9[%c0_30, %c0_31] : memref<8x128xf32, #tpu.memory_space<vmem>>, vector<8x128xf32>
      tpu.vector_store %arg9[%c0_30, %c0_31], %49 {strides = array<i32>} : memref<8x128xf32, #tpu.memory_space<vmem>>, vector<8x128xf32>,
    } else {
    }
    return
  }
  func.func @transform_0(%arg0: i32, %arg1: i32) -> (i32, i32) {
    %c0_i32 = arith.constant 0 : i32
    %c0_i32_0 = arith.constant 0 : i32
    return %arg0, %c0_i32 : i32, i32
  }
  func.func @transform_1(%arg0: i32, %arg1: i32) -> (i32, i32) {
    %c0_i32 = arith.constant 0 : i32
    %c0_i32_0 = arith.constant 0 : i32
    return %arg1, %c0_i32 : i32, i32
  }
  func.func @transform_2(%arg0: i32, %arg1: i32) -> (i32, i32) {
    %c0_i32 = arith.constant 0 : i32
    %c0_i32_0 = arith.constant 0 : i32
    return %c0_i32, %arg1 : i32, i32
  }
  func.func @transform_3(%arg0: i32, %arg1: i32) -> (i32, i32) {
    %c0_i32 = arith.constant 0 : i32
    %c0_i32_0 = arith.constant 0 : i32
    return %c0_i32, %arg1 : i32, i32
  }
  func.func @transform_4(%arg0: i32, %arg1: i32) -> (i32, i32) {
    %c0_i32 = arith.constant 0 : i32
    %c0_i32_0 = arith.constant 0 : i32
    %c0_i32_1 = arith.constant 0 : i32
    return %c0_i32, %c0_i32_0 : i32, i32
  }
  func.func @transform_5(%arg0: i32, %arg1: i32) -> (i32, i32) {
    %c0_i32 = arith.constant 0 : i32
    %c0_i32_0 = arith.constant 0 : i32
    %c0_i32_1 = arith.constant 0 : i32
    return %c0_i32, %c0_i32_0 : i32, i32
  }
  func.func @transform_6(%arg0: i32, %arg1: i32) -> (i32, i32) {
    %c0_i32 = arith.constant 0 : i32
    %c0_i32_0 = arith.constant 0 : i32
    %c0_i32_1 = arith.constant 0 : i32
    return %c0_i32, %c0_i32_0 : i32, i32
  }
  func.func @transform_7(%arg0: i32, %arg1: i32) -> (i32, i32) {
    %c0_i32 = arith.constant 0 : i32
    %c0_i32_0 = arith.constant 0 : i32
    return %arg0, %c0_i32 : i32, i32
  }
}

</mosaic_0001>

<llo_original>
// kernel: tpu_custom_call.1
$region0: #{tpu_custom_call.1}
  #allocation0 [shape = 'u32[]', space=smem, size = 0x4, offset = 0x4, fixed_abs, tag = 'smem constant byte address 0x4 - core index']
  #allocation1 [shape = 'u32[144,128]{1,0:T(1,128)}', space=vmem, size = 0x12000, scoped, tag = 'internal scratch']
  #allocation2 [shape = 'f32[8,128]{1,0:T(8,128)}', space=vmem, size = 0x1000, scoped, tag = 'scratch operand']
  %s0 = inlined_call_operand.hbm [shape: f32[16,128], index: 0, kind: input, shape index: {}]
  %s1 = inlined_call_operand.hbm [shape: f32[256,128], index: 1, kind: input, shape index: {}]
  %s2 = inlined_call_operand.vmem [shape: f32[1,256], index: 2, kind: input, shape index: {}]
  %s3 = inlined_call_operand.hbm [shape: f32[128,256], index: 3, kind: input, shape index: {}]
  %s4 = inlined_call_operand.vmem [shape: f32[1,128], index: 4, kind: input, shape index: {}]
  %s5 = inlined_call_operand.vmem [shape: f32[1,128], index: 5, kind: input, shape index: {}]
  %s6 = inlined_call_operand.vmem [shape: f32[1,128], index: 6, kind: input, shape index: {}]
  %s7 = inlined_call_operand.hbm [shape: f32[16,128], index: 7, kind: output, shape index: {}]
  %s8 = sld [smem:[#allocation0]]
  $region81: #{tpu_custom_call.1} parent=0
    _
  %s10 = ssub.s32 1, %s8
  %s11 = scalar_select 0, %s10, %s8
  $region1: #{tpu_custom_call.1} parent=0
    #allocation3 [shape = 'u8[8192]{0}', space=vmem, size = 0x2000, scoped, tag = 'input window, operand 0']
    #allocation4 [shape = 's32[2]{0}', space=sflag, size = 0x8, scoped, tag = 'scoped memory for tpu_custom_call.1']
    #allocation5 [shape = 's32[2]{0}', space=sflag, size = 0x8, scoped, tag = 'scoped memory for tpu_custom_call.1']
    #allocation6 [shape = 'u8[131072]{0}', space=vmem, size = 0x20000, scoped, tag = 'input window, operand 1, single buffered']
    #allocation7 [shape = 's32[1]{0}', space=sflag, size = 0x4, scoped, tag = 'scoped memory for tpu_custom_call.1']
    #allocation8 [shape = 'u8[131072]{0}', space=vmem, size = 0x20000, scoped, tag = 'input window, operand 3, single buffered']
    #allocation9 [shape = 'u8[8192]{0}', space=vmem, size = 0x2000, scoped, tag = 'output window, operand 0']
    %12 = vsyncpa [#allocation4], 0
    %s13 = scalar_lea.sflag [#allocation4], 1
    %14 = vsyncpa %s13, 0
    %15 = vsyncpa [#allocation7], 0
    %16 = vsyncpa [#allocation5], 0
    %s17 = scalar_lea.sflag [#allocation5], 1
    %18 = vsyncpa %s17, 0
    loop: start=0, step=1, limit=4
    $region2: #{tpu_custom_call.1} parent=1 // loop_pre_header
      _
    $region3: #{tpu_custom_call.1} parent=1 // loop_header
      %s20 = sphi 0, %s24
      %p21 = scmp.ge.s32.totalorder %s20, 4
      %s27 = sphi 0, %s39
      %s28 = sphi 0, %s35
      %s29 = sphi 0, %s27
      %s30 = sphi 0, %s28
      %s31 = sphi 0, %s29
      %s32 = sphi 0, %s30
      %s42 = sphi 0, %s44
      %s45 = sphi 0, %s42
      %s46 = sphi 0, %s45
      %s62 = sphi 0, %s46
      %s68 = sphi 0, %s70
      %s71 = sphi 0, %s68
      %s72 = sphi 0, %s71
      %s88 = sphi 0, %s72
      %s94 = sphi 0, %s96
      %s97 = sphi 0, %s94
      %s98 = sphi 0, %s97
      %s114 = sphi 0, %s98
      %s120 = sphi 0, %s122
      %s123 = sphi 0, %s120
      %s124 = sphi 0, %s123
      %s140 = sphi 0, %s124
      %s144 = sphi 0, %s144
      %s146 = sphi 0, %s144
      %s147 = sphi 0, %s146
      %s161 = sphi 0, %s147
      %s165 = sphi 0, %s165
      %s167 = sphi 0, %s165
      %s168 = sphi 0, %s167
      %s182 = sphi 0, %s168
      %s186 = sphi 0, %s186
      %s188 = sphi 0, %s186
      %s189 = sphi 0, %s188
      %s203 = sphi 0, %s189
      %s209 = sphi 0, %s211
      %s212 = sphi 0, %s209
      %s213 = sphi 0, %s212
      %s229 = sphi 0, %s213
    $region4: #{tpu_custom_call.1} parent=1 // loop_header_branch
      %23 = sbr.rel (%p21) target = $region8
    $region5: #{tpu_custom_call.1} parent=1 // loop_body
      %s25 = ssub.s32 %s20, 1
      %s26 = ssub.s32 %s20, 2
      %s33 = sadd.s32 1, %s28
      %p34 = scmp.ge.s32.totalorder %s33, 1
      %s35 = scalar_select %p34, 0, %s33
      %s36 = sadd.s32 1, %s27
      %s37 = scalar_select %p34, %s36, %s27
      %p38 = scmp.ge.s32.totalorder %s37, 2
      %s39 = scalar_select %p38, 0, %s37
      %s40 = ssub.s32 %s27, %s39
      %p41 = scmp.eq.s32.totalorder %s40, 0
      %s43 = sadd.s32 %s42, 1
      %s44 = scalar_select %p41, %s42, %s43
      %p47 = pneg %p41
      %p48 = scmp.eq.s32.totalorder %s20, 1
      %p49 = por %p47, %p48
      %p50 = scmp.ne.s32.totalorder %s42, %s45
      %p51 = scmp.eq.s32.totalorder %s20, 0
      %p52 = por %p50, %p51
      %p53 = scmp.ne.s32.totalorder %s42, %s45
      %p54 = scmp.eq.s32.totalorder %s25, 1
      %p55 = por %p53, %p54
      %p56 = scmp.ne.s32.totalorder %s45, %s46
      %p57 = scmp.eq.s32.totalorder %s25, 0
      %p58 = por %p56, %p57
      %p59 = scmp.ne.s32.totalorder %s45, %s46
      %p60 = scmp.eq.s32.totalorder %s26, 1
      %p61 = por %p59, %p60
      %p63 = scmp.ne.s32.totalorder %s46, %s62
      %p64 = scmp.eq.s32.totalorder %s26, 0
      %p65 = por %p63, %p64
      %s66 = ssub.s32 %s28, %s35
      %p67 = scmp.eq.s32.totalorder %s66, 0
      %s69 = sadd.s32 %s68, 1
      %s70 = scalar_select %p67, %s68, %s69
      %p73 = pneg %p67
      %p74 = scmp.eq.s32.totalorder %s20, 1
      %p75 = por %p73, %p74
      %p76 = scmp.ne.s32.totalorder %s68, %s71
      %p77 = scmp.eq.s32.totalorder %s20, 0
      %p78 = por %p76, %p77
      %p79 = scmp.ne.s32.totalorder %s68, %s71
      %p80 = scmp.eq.s32.totalorder %s25, 1
      %p81 = por %p79, %p80
      %p82 = scmp.ne.s32.totalorder %s71, %s72
      %p83 = scmp.eq.s32.totalorder %s25, 0
      %p84 = por %p82, %p83
      %p85 = scmp.ne.s32.totalorder %s71, %s72
      %p86 = scmp.eq.s32.totalorder %s26, 1
      %p87 = por %p85, %p86
      %p89 = scmp.ne.s32.totalorder %s72, %s88
      %p90 = scmp.eq.s32.totalorder %s26, 0
      %p91 = por %p89, %p90
      %s92 = ssub.s32 %s28, %s35
      %p93 = scmp.eq.s32.totalorder %s92, 0
      %s95 = sadd.s32 %s94, 1
      %s96 = scalar_select %p93, %s94, %s95
      %p99 = pneg %p93
      %p100 = scmp.eq.s32.totalorder %s20, 1
      %p101 = por %p99, %p100
      %p102 = scmp.ne.s32.totalorder %s94, %s97
      %p103 = scmp.eq.s32.totalorder %s20, 0
      %p104 = por %p102, %p103
      %p105 = scmp.ne.s32.totalorder %s94, %s97
      %p106 = scmp.eq.s32.totalorder %s25, 1
      %p107 = por %p105, %p106
      %p108 = scmp.ne.s32.totalorder %s97, %s98
      %p109 = scmp.eq.s32.totalorder %s25, 0
      %p110 = por %p108, %p109
      %p111 = scmp.ne.s32.totalorder %s97, %s98
      %p112 = scmp.eq.s32.totalorder %s26, 1
      %p113 = por %p111, %p112
      %p115 = scmp.ne.s32.totalorder %s98, %s114
      %p116 = scmp.eq.s32.totalorder %s26, 0
      %p117 = por %p115, %p116
      %s118 = ssub.s32 %s28, %s35
      %p119 = scmp.eq.s32.totalorder %s118, 0
      %s121 = sadd.s32 %s120, 1
      %s122 = scalar_select %p119, %s120, %s121
      %p125 = pneg %p119
      %p126 = scmp.eq.s32.totalorder %s20, 1
      %p127 = por %p125, %p126
      %p128 = scmp.ne.s32.totalorder %s120, %s123
      %p129 = scmp.eq.s32.totalorder %s20, 0
      %p130 = por %p128, %p129
      %p131 = scmp.ne.s32.totalorder %s120, %s123
      %p132 = scmp.eq.s32.totalorder %s25, 1
      %p133 = por %p131, %p132
      %p134 = scmp.ne.s32.totalorder %s123, %s124
      %p135 = scmp.eq.s32.totalorder %s25, 0
      %p136 = por %p134, %p135
      %p137 = scmp.ne.s32.totalorder %s123, %s124
      %p138 = scmp.eq.s32.totalorder %s26, 1
      %p139 = por %p137, %p138
      %p141 = scmp.ne.s32.totalorder %s124, %s140
      %p142 = scmp.eq.s32.totalorder %s26, 0
      %p143 = por %p141, %p142
      %s145 = sadd.s32 %s144, 1
      %p148 = scmp.eq.s32.totalorder %s20, 1
      %p149 = scmp.ne.s32.totalorder %s144, %s146
      %p150 = scmp.eq.s32.totalorder %s20, 0
      %p151 = por %p149, %p150
      %p152 = scmp.ne.s32.totalorder %s144, %s146
      %p153 = scmp.eq.s32.totalorder %s25, 1
      %p154 = por %p152, %p153
      %p155 = scmp.ne.s32.totalorder %s146, %s147
      %p156 = scmp.eq.s32.totalorder %s25, 0
      %p157 = por %p155, %p156
      %p158 = scmp.ne.s32.totalorder %s146, %s147
      %p159 = scmp.eq.s32.totalorder %s26, 1
      %p160 = por %p158, %p159
      %p162 = scmp.ne.s32.totalorder %s147, %s161
      %p163 = scmp.eq.s32.totalorder %s26, 0
      %p164 = por %p162, %p163
      %s166 = sadd.s32 %s165, 1
      %p169 = scmp.eq.s32.totalorder %s20, 1
      %p170 = scmp.ne.s32.totalorder %s165, %s167
      %p171 = scmp.eq.s32.totalorder %s20, 0
      %p172 = por %p170, %p171
      %p173 = scmp.ne.s32.totalorder %s165, %s167
      %p174 = scmp.eq.s32.totalorder %s25, 1
      %p175 = por %p173, %p174
      %p176 = scmp.ne.s32.totalorder %s167, %s168
      %p177 = scmp.eq.s32.totalorder %s25, 0
      %p178 = por %p176, %p177
      %p179 = scmp.ne.s32.totalorder %s167, %s168
      %p180 = scmp.eq.s32.totalorder %s26, 1
      %p181 = por %p179, %p180
      %p183 = scmp.ne.s32.totalorder %s168, %s182
      %p184 = scmp.eq.s32.totalorder %s26, 0
      %p185 = por %p183, %p184
      %s187 = sadd.s32 %s186, 1
      %p190 = scmp.eq.s32.totalorder %s20, 1
      %p191 = scmp.ne.s32.totalorder %s186, %s188
      %p192 = scmp.eq.s32.totalorder %s20, 0
      %p193 = por %p191, %p192
      %p194 = scmp.ne.s32.totalorder %s186, %s188
      %p195 = scmp.eq.s32.totalorder %s25, 1
      %p196 = por %p194, %p195
      %p197 = scmp.ne.s32.totalorder %s188, %s189
      %p198 = scmp.eq.s32.totalorder %s25, 0
      %p199 = por %p197, %p198
      %p200 = scmp.ne.s32.totalorder %s188, %s189
      %p201 = scmp.eq.s32.totalorder %s26, 1
      %p202 = por %p200, %p201
      %p204 = scmp.ne.s32.totalorder %s189, %s203
      %p205 = scmp.eq.s32.totalorder %s26, 0
      %p206 = por %p204, %p205
      %s207 = ssub.s32 %s27, %s39
      %p208 = scmp.eq.s32.totalorder %s207, 0
      %s210 = sadd.s32 %s209, 1
      %s211 = scalar_select %p208, %s209, %s210
      %p214 = pneg %p208
      %p215 = scmp.eq.s32.totalorder %s20, 1
      %p216 = por %p214, %p215
      %p217 = scmp.ne.s32.totalorder %s209, %s212
      %p218 = scmp.eq.s32.totalorder %s20, 0
      %p219 = por %p217, %p218
      %p220 = scmp.ne.s32.totalorder %s209, %s212
      %p221 = scmp.eq.s32.totalorder %s25, 1
      %p222 = por %p220, %p221
      %p223 = scmp.ne.s32.totalorder %s212, %s213
      %p224 = scmp.eq.s32.totalorder %s25, 0
      %p225 = por %p223, %p224
      %p226 = scmp.ne.s32.totalorder %s212, %s213
      %p227 = scmp.eq.s32.totalorder %s26, 1
      %p228 = por %p226, %p227
      %p230 = scmp.ne.s32.totalorder %s213, %s229
      %p231 = scmp.eq.s32.totalorder %s26, 0
      %p232 = por %p230, %p231
      %p233 = scmp.le.s32.totalorder 1, %s20
      %p234 = scmp.lt.s32.totalorder %s20, 3
      %p235 = pnand %p233, %p234
      %p236 = pneg %p235
      // Predicated region
      $region9: #{tpu_custom_call.1} parent=5 // pred_check
        _
      $region10: #{tpu_custom_call.1} parent=5 // pred_check_branch
        %238 = sbr.rel (%p235) target = $region12
      $region11: #{tpu_custom_call.1} parent=5 // pred_region
        %s239 = ssub.s32 %s20, 1
        // Predicated region
        $region13: #{tpu_custom_call.1} parent=11 // pred_check
          %p240 = pneg %p84
        $region14: #{tpu_custom_call.1} parent=11 // pred_check_branch
          %242 = sbr.rel (%p240) target = $region16
        $region15: #{tpu_custom_call.1} parent=11 // pred_region
          %s243 = smul.u32 32, %s30
          %s245 = ssub.s32 4096, 4096
          %246 = vsyncadd [#allocation7], %s245
          %s247 = smul.addr %s243, 128
          %s248 = scalar_lea.hbm %s1, %s247
          %s249 = sshll.u32 [#allocation6], 4
          %s250 = int_to_ptr.vmem [resolvable:$true] %s249
          %255 = dma.hbm_to_vmem [thread:$0]  %s248, 4096, %s250, [#allocation7], 128, 128, 8
        $region16: #{tpu_custom_call.1} parent=11 // pred_fallthru
          _
        // Predicated region
        $region17: #{tpu_custom_call.1} parent=11 // pred_check
          %p256 = pneg %p110
        $region18: #{tpu_custom_call.1} parent=11 // pred_check_branch
          %258 = sbr.rel (%p256) target = $region20
        $region19: #{tpu_custom_call.1} parent=11 // pred_region
          %s259 = smul.u32 2, %s30
          %p260 = scmp.lt.s32.totalorder %s259, 1
          %s261 = scalar_select %p260, %s259, 1
          %s262 = scalar_lea.vmem %s2, %s261
          %s263 = smul.u32 2, %s30
        $region20: #{tpu_custom_call.1} parent=11 // pred_fallthru
          _
        // Predicated region
        $region21: #{tpu_custom_call.1} parent=11 // pred_check
          %p264 = pneg %p136
        $region22: #{tpu_custom_call.1} parent=11 // pred_check_branch
          %266 = sbr.rel (%p264) target = $region24
        $region23: #{tpu_custom_call.1} parent=11 // pred_region
          %s267 = smul.u32 2, %s30
          %s269 = ssub.s32 4096, 4096
          %270 = vsyncadd [#allocation7], %s269
          %s271 = smul.addr %s267, 128
          %s272 = scalar_lea.hbm %s3, %s271
          %s273 = sshll.u32 [#allocation8], 4
          %s274 = int_to_ptr.vmem [resolvable:$true] %s273
          %279 = dma.hbm_to_vmem [thread:$0]  %s272, 4096, %s274, [#allocation7], 256, 256, 16
        $region24: #{tpu_custom_call.1} parent=11 // pred_fallthru
          _
        // Predicated region
        $region25: #{tpu_custom_call.1} parent=11 // pred_check
          %p280 = pneg %p157
        $region26: #{tpu_custom_call.1} parent=11 // pred_check_branch
          %282 = sbr.rel (%p280) target = $region28
        $region27: #{tpu_custom_call.1} parent=11 // pred_region
          _
        $region28: #{tpu_custom_call.1} parent=11 // pred_fallthru
          _
        // Predicated region
        $region29: #{tpu_custom_call.1} parent=11 // pred_check
          %p283 = pneg %p178
        $region30: #{tpu_custom_call.1} parent=11 // pred_check_branch
          %285 = sbr.rel (%p283) target = $region32
        $region31: #{tpu_custom_call.1} parent=11 // pred_region
          _
        $region32: #{tpu_custom_call.1} parent=11 // pred_fallthru
          _
        // Predicated region
        $region33: #{tpu_custom_call.1} parent=11 // pred_check
          %p286 = pneg %p199
        $region34: #{tpu_custom_call.1} parent=11 // pred_check_branch
          %288 = sbr.rel (%p286) target = $region36
        $region35: #{tpu_custom_call.1} parent=11 // pred_region
          _
        $region36: #{tpu_custom_call.1} parent=11 // pred_fallthru
          _
      $region12: #{tpu_custom_call.1} parent=5 // pred_fallthru
        _
      %p289 = scmp.lt.s32.totalorder %s20, 2
      // Predicated region
      $region37: #{tpu_custom_call.1} parent=5 // pred_check
        %p290 = pneg %p289
      $region38: #{tpu_custom_call.1} parent=5 // pred_check_branch
        %292 = sbr.rel (%p290) target = $region40
      $region39: #{tpu_custom_call.1} parent=5 // pred_region
        // Predicated region
        $region41: #{tpu_custom_call.1} parent=39 // pred_check
          %p293 = pneg %p52
        $region42: #{tpu_custom_call.1} parent=39 // pred_check_branch
          %295 = sbr.rel (%p293) target = $region44
        $region43: #{tpu_custom_call.1} parent=39 // pred_region
          %s296 = sand.u32 %s42, 1
          %s297 = scalar_lea.sflag [#allocation4], %s296
          %s298 = sand.u32 %s42, 1
          %s299 = smul.addr %s298, 8
          %s300 = scalar_lea.vmem [#allocation3], %s299
          %s302 = ssub.s32 128, 128
          %303 = vsyncadd %s297, %s302
          %s304 = smul.addr %s27, 128
          %s305 = scalar_lea.hbm %s0, %s304
          %s307 = sshll.u32 %s300, 4
          %s308 = int_to_ptr.vmem [resolvable:$true] %s307
          %310 = dma.hbm_to_vmem [thread:$0]  %s305, 128, %s308, %s297
        $region44: #{tpu_custom_call.1} parent=39 // pred_fallthru
          _
      $region40: #{tpu_custom_call.1} parent=5 // pred_fallthru
        _
      %p311 = scmp.le.s32.totalorder 1, %s20
      %p312 = scmp.lt.s32.totalorder %s20, 3
      %p313 = pnand %p311, %p312
      %p314 = pneg %p313
      // Predicated region
      $region45: #{tpu_custom_call.1} parent=5 // pred_check
        _
      $region46: #{tpu_custom_call.1} parent=5 // pred_check_branch
        %316 = sbr.rel (%p313) target = $region48
      $region47: #{tpu_custom_call.1} parent=5 // pred_region
        %s317 = ssub.s32 %s20, 1
        %s318 = sand.u32 %s45, 1
        %s319 = scalar_lea.sflag [#allocation4], %s318
        %s320 = sand.u32 %s45, 1
        %s321 = smul.addr %s320, 8
        %s322 = scalar_lea.vmem [#allocation3], %s321
        // Predicated region
        $region49: #{tpu_custom_call.1} parent=47 // pred_check
          %p323 = pneg %p58
        $region50: #{tpu_custom_call.1} parent=47 // pred_check_branch
          %325 = sbr.rel (%p323) target = $region52
        $region51: #{tpu_custom_call.1} parent=47 // pred_region
          %326 = dma.done %s319, 128
        $region52: #{tpu_custom_call.1} parent=47 // pred_fallthru
          _
        // Predicated region
        $region53: #{tpu_custom_call.1} parent=47 // pred_check
          %p327 = pneg %p84
        $region54: #{tpu_custom_call.1} parent=47 // pred_check_branch
          %329 = sbr.rel (%p327) target = $region56
        $region55: #{tpu_custom_call.1} parent=47 // pred_region
          %330 = dma.done [#allocation7], 4096
        $region56: #{tpu_custom_call.1} parent=47 // pred_fallthru
          _
        // Predicated region
        $region57: #{tpu_custom_call.1} parent=47 // pred_check
          %p331 = pneg %p136
        $region58: #{tpu_custom_call.1} parent=47 // pred_check_branch
          %333 = sbr.rel (%p331) target = $region60
        $region59: #{tpu_custom_call.1} parent=47 // pred_region
          %334 = dma.done [#allocation7], 4096
        $region60: #{tpu_custom_call.1} parent=47 // pred_fallthru
          _
        %s335 = sand.u32 %s45, 1
        %s336 = scalar_lea.sflag [#allocation4], %s335
        %s337 = sand.u32 %s45, 1
        %s338 = smul.addr %s337, 8
        %s339 = scalar_lea.vmem [#allocation3], %s338
        %p340 = pneg %p58
        %p341 = pneg %p55
        %p342 = pneg %p84
        %p343 = pneg %p81
        %s344 = smul.u32 2, %s30
        %p345 = scmp.lt.s32.totalorder %s344, 1
        %s346 = scalar_select %p345, %s344, 1
        %s347 = scalar_lea.vmem %s2, %s346
        %p348 = pneg %p110
        %p349 = pneg %p107
        %p350 = pneg %p136
        %p351 = pneg %p133
        %p352 = pneg %p157
        %p353 = pneg %p154
        %p354 = pneg %p178
        %p355 = pneg %p175
        %p356 = pneg %p199
        %p357 = pneg %p196
        %p358 = pneg %p225
        %p359 = pneg %p222
        %s360 = sand.u32 %s212, 1
        %s361 = scalar_lea.sflag [#allocation5], %s360
        %s362 = sand.u32 %s212, 1
        %s363 = smul.addr %s362, 8
        %s364 = scalar_lea.vmem [#allocation9], %s363
        %s365 = smul.u32 32, %s30
        %s366 = smul.u32 2, %s30
        %p367 = scmp.lt.s32.totalorder %s366, 1
        %s368 = scalar_select %p367, %s366, 1
        %s369 = scalar_lea.vmem %s2, %s368
        %s370 = smul.u32 2, %s30
        %s371 = smul.u32 2, %s30
        %p372 = scmp.eq.s32.totalorder %s30, 0
        // Predicated region
        $region61: #{tpu_custom_call.1} parent=47 // pred_check
          %p373 = pneg %p372
        $region62: #{tpu_custom_call.1} parent=47 // pred_check_branch
          %375 = sbr.rel (%p373) target = $region64
        $region63: #{tpu_custom_call.1} parent=47 // pred_region
          %376 = vst [vmem:[#allocation2] sm:$0xff] 0.0
        $region64: #{tpu_custom_call.1} parent=47 // pred_fallthru
          _
        %v377 = vld [vmem:[%s322] sm:$0xff]
        %v378 = vld [vmem:[#allocation6] sm:$0xff]
        %v379 = vld [vmem:[#allocation6 + $0x8] sm:$0xff]
        %v380 = vld [vmem:[#allocation6 + $0x10] sm:$0xff]
        %v381 = vld [vmem:[#allocation6 + $0x18] sm:$0xff]
        %v382 = vld [vmem:[#allocation6 + $0x20] sm:$0xff]
        %v383 = vld [vmem:[#allocation6 + $0x28] sm:$0xff]
        %v384 = vld [vmem:[#allocation6 + $0x30] sm:$0xff]
        %v385 = vld [vmem:[#allocation6 + $0x38] sm:$0xff]
        %v386 = vld [vmem:[#allocation6 + $0x40] sm:$0xff]
        %v387 = vld [vmem:[#allocation6 + $0x48] sm:$0xff]
        %v388 = vld [vmem:[#allocation6 + $0x50] sm:$0xff]
        %v389 = vld [vmem:[#allocation6 + $0x58] sm:$0xff]
        %v390 = vld [vmem:[#allocation6 + $0x60] sm:$0xff]
        %v391 = vld [vmem:[#allocation6 + $0x68] sm:$0xff]
        %v392 = vld [vmem:[#allocation6 + $0x70] sm:$0xff]
        %v393 = vld [vmem:[#allocation6 + $0x78] sm:$0xff]
        %v394 = vld [vmem:[#allocation6 + $0x80] sm:$0xff]
        %v395 = vld [vmem:[#allocation6 + $0x88] sm:$0xff]
        %v396 = vld [vmem:[#allocation6 + $0x90] sm:$0xff]
        %v397 = vld [vmem:[#allocation6 + $0x98] sm:$0xff]
        %v398 = vld [vmem:[#allocation6 + $0xa0] sm:$0xff]
        %v399 = vld [vmem:[#allocation6 + $0xa8] sm:$0xff]
        %v400 = vld [vmem:[#allocation6 + $0xb0] sm:$0xff]
        %v401 = vld [vmem:[#allocation6 + $0xb8] sm:$0xff]
        %v402 = vld [vmem:[#allocation6 + $0xc0] sm:$0xff]
        %v403 = vld [vmem:[#allocation6 + $0xc8] sm:$0xff]
        %v404 = vld [vmem:[#allocation6 + $0xd0] sm:$0xff]
        %v405 = vld [vmem:[#allocation6 + $0xd8] sm:$0xff]
        %v406 = vld [vmem:[#allocation6 + $0xe0] sm:$0xff]
        %v407 = vld [vmem:[#allocation6 + $0xe8] sm:$0xff]
        %v408 = vld [vmem:[#allocation6 + $0xf0] sm:$0xff]
        %v409 = vld [vmem:[#allocation6 + $0xf8] sm:$0xff]
        %v410 = vld [vmem:[%s369] sm:$0x3]
        %v412 = vlaneseq
        %v413 = vshrl.u32 %v412, 7
        %v414 = vsub.s32 0, %v413
        %v415 = vrot.slane %v410, %v414
        %v416 = vlaneseq
        %v417 = vshrl.u32 %v416, 7
        %v418 = vsub.s32 1, %v417
        %v419 = vrot.slane %v410, %v418
        %422 = vmatprep.subr.mxu0 0.0
        %423 = vmatpush1.xpose.msra.mxu0 %v393
        %424 = vmatprep.subr.mxu0 0.0
        %425 = vmatpush1.xpose.msra.mxu0 %v392
        %426 = vmatprep.subr.mxu0 0.0
        %427 = vmatpush1.xpose.msra.mxu0 %v391
        %428 = vmatprep.subr.mxu0 0.0
        %429 = vmatpush1.xpose.msra.mxu0 %v390
        %430 = vmatprep.subr.mxu0 0.0
        %431 = vmatpush1.xpose.msra.mxu0 %v389
        %432 = vmatprep.subr.mxu0 0.0
        %433 = vmatpush1.xpose.msra.mxu0 %v388
        %434 = vmatprep.subr.mxu0 0.0
        %435 = vmatpush1.xpose.msra.mxu0 %v387
        %436 = vmatprep.subr.mxu0 0.0
        %437 = vmatpush1.xpose.msra.mxu0 %v386
        %438 = vmatprep.subr.mxu0 0.0
        %439 = vmatpush1.xpose.msra.mxu0 %v385
        %440 = vmatprep.subr.mxu0 0.0
        %441 = vmatpush1.xpose.msra.mxu0 %v384
        %442 = vmatprep.subr.mxu0 0.0
        %443 = vmatpush1.xpose.msra.mxu0 %v383
        %444 = vmatprep.subr.mxu0 0.0
        %445 = vmatpush1.xpose.msra.mxu0 %v382
        %446 = vmatprep.subr.mxu0 0.0
        %447 = vmatpush1.xpose.msra.mxu0 %v381
        %448 = vmatprep.subr.mxu0 0.0
        %449 = vmatpush1.xpose.msra.mxu0 %v380
        %450 = vmatprep.subr.mxu0 0.0
        %451 = vmatpush1.xpose.msra.mxu0 %v379
        %452 = vmatprep.subr.mxu0 0.0
        %453 = vmatpush1.xpose.msra.mxu0 %v378
        %454 = vmatprep.subr.mxu0 0.0
        %455 = vmatpush2.xpose.msra.mxu0 %v409
        %456 = vmatprep.subr.mxu0 0.0
        %457 = vmatpush2.xpose.msra.mxu0 %v408
        %458 = vmatprep.subr.mxu0 0.0
        %459 = vmatpush2.xpose.msra.mxu0 %v407
        %460 = vmatprep.subr.mxu0 0.0
        %461 = vmatpush2.xpose.msra.mxu0 %v406
        %462 = vmatprep.subr.mxu0 0.0
        %463 = vmatpush2.xpose.msra.mxu0 %v405
        %464 = vmatprep.subr.mxu0 0.0
        %465 = vmatpush2.xpose.msra.mxu0 %v404
        %466 = vmatprep.subr.mxu0 0.0
        %467 = vmatpush2.xpose.msra.mxu0 %v403
        %468 = vmatprep.subr.mxu0 0.0
        %469 = vmatpush2.xpose.msra.mxu0 %v402
        %470 = vmatprep.subr.mxu0 0.0
        %471 = vmatpush2.xpose.msra.mxu0 %v401
        %472 = vmatprep.subr.mxu0 0.0
        %473 = vmatpush2.xpose.msra.mxu0 %v400
        %474 = vmatprep.subr.mxu0 0.0
        %475 = vmatpush2.xpose.msra.mxu0 %v399
        %476 = vmatprep.subr.mxu0 0.0
        %477 = vmatpush2.xpose.msra.mxu0 %v398
        %478 = vmatprep.subr.mxu0 0.0
        %479 = vmatpush2.xpose.msra.mxu0 %v397
        %480 = vmatprep.subr.mxu0 0.0
        %481 = vmatpush2.xpose.msra.mxu0 %v396
        %482 = vmatprep.subr.mxu0 0.0
        %483 = vmatpush2.xpose.msra.mxu0 %v395
        %484 = vmatprep.subr.mxu0 0.0
        %485 = vmatpush2.xpose.msra.mxu0 %v394
        %486 = vmatprep.mubr.f32.mxu0 0.0
        %487 = vmatmul.mubr.f32.gmra.mxu0 %v377
        %v488 = vpop.f32.mrf.mxu0
        %v489 = vadd.f32 %v415, %v488
        %v490 = vpop.f32.mrf.mxu0
        %v491 = vadd.f32 %v419, %v490
        %492 = vdwg.mxu0
        %v493 = vmax.f32 %v489, 0.0
        %v494 = vmax.f32 %v491, 0.0
        %v495 = vld [vmem:[#allocation2] sm:$0xff]
        %v496 = vld [vmem:[#allocation8] sm:$0xff]
        %v497 = vld [vmem:[#allocation8 + $0x8] sm:$0xff]
        %v498 = vld [vmem:[#allocation8 + $0x10] sm:$0xff]
        %v499 = vld [vmem:[#allocation8 + $0x18] sm:$0xff]
        %v500 = vld [vmem:[#allocation8 + $0x20] sm:$0xff]
        %v501 = vld [vmem:[#allocation8 + $0x28] sm:$0xff]
        %v502 = vld [vmem:[#allocation8 + $0x30] sm:$0xff]
        %v503 = vld [vmem:[#allocation8 + $0x38] sm:$0xff]
        %v504 = vld [vmem:[#allocation8 + $0x40] sm:$0xff]
        %v505 = vld [vmem:[#allocation8 + $0x48] sm:$0xff]
        %v506 = vld [vmem:[#allocation8 + $0x50] sm:$0xff]
        %v507 = vld [vmem:[#allocation8 + $0x58] sm:$0xff]
        %v508 = vld [vmem:[#allocation8 + $0x60] sm:$0xff]
        %v509 = vld [vmem:[#allocation8 + $0x68] sm:$0xff]
        %v510 = vld [vmem:[#allocation8 + $0x70] sm:$0xff]
        %v511 = vld [vmem:[#allocation8 + $0x78] sm:$0xff]
        %v512 = vld [vmem:[#allocation8 + $0x80] sm:$0xff]
        %v513 = vld [vmem:[#allocation8 + $0x88] sm:$0xff]
        %v514 = vld [vmem:[#allocation8 + $0x90] sm:$0xff]
        %v515 = vld [vmem:[#allocation8 + $0x98] sm:$0xff]
        %v516 = vld [vmem:[#allocation8 + $0xa0] sm:$0xff]
        %v517 = vld [vmem:[#allocation8 + $0xa8] sm:$0xff]
        %v518 = vld [vmem:[#allocation8 + $0xb0] sm:$0xff]
        %v519 = vld [vmem:[#allocation8 + $0xb8] sm:$0xff]
        %v520 = vld [vmem:[#allocation8 + $0xc0] sm:$0xff]
        %v521 = vld [vmem:[#allocation8 + $0xc8] sm:$0xff]
        %v522 = vld [vmem:[#allocation8 + $0xd0] sm:$0xff]
        %v523 = vld [vmem:[#allocation8 + $0xd8] sm:$0xff]
        %v524 = vld [vmem:[#allocation8 + $0xe0] sm:$0xff]
        %v525 = vld [vmem:[#allocation8 + $0xe8] sm:$0xff]
        %v526 = vld [vmem:[#allocation8 + $0xf0] sm:$0xff]
        %v527 = vld [vmem:[#allocation8 + $0xf8] sm:$0xff]
        %528 = vmatprep.subr.mxu0 %v527
        %529 = vmatpush1.xpose.msra.mxu0 %v526
        %530 = vmatprep.subr.mxu0 %v525
        %531 = vmatpush1.xpose.msra.mxu0 %v524
        %532 = vmatprep.subr.mxu0 %v523
        %533 = vmatpush1.xpose.msra.mxu0 %v522
        %534 = vmatprep.subr.mxu0 %v521
        %535 = vmatpush1.xpose.msra.mxu0 %v520
        %536 = vmatprep.subr.mxu0 %v519
        %537 = vmatpush1.xpose.msra.mxu0 %v518
        %538 = vmatprep.subr.mxu0 %v517
        %539 = vmatpush1.xpose.msra.mxu0 %v516
        %540 = vmatprep.subr.mxu0 %v515
        %541 = vmatpush1.xpose.msra.mxu0 %v514
        %542 = vmatprep.subr.mxu0 %v513
        %543 = vmatpush1.xpose.msra.mxu0 %v512
        %544 = vmatprep.subr.mxu0 %v511
        %545 = vmatpush1.xpose.msra.mxu0 %v510
        %546 = vmatprep.subr.mxu0 %v509
        %547 = vmatpush1.xpose.msra.mxu0 %v508
        %548 = vmatprep.subr.mxu0 %v507
        %549 = vmatpush1.xpose.msra.mxu0 %v506
        %550 = vmatprep.subr.mxu0 %v505
        %551 = vmatpush1.xpose.msra.mxu0 %v504
        %552 = vmatprep.subr.mxu0 %v503
        %553 = vmatpush1.xpose.msra.mxu0 %v502
        %554 = vmatprep.subr.mxu0 %v501
        %555 = vmatpush1.xpose.msra.mxu0 %v500
        %556 = vmatprep.subr.mxu0 %v499
        %557 = vmatpush1.xpose.msra.mxu0 %v498
        %558 = vmatprep.subr.mxu0 %v497
        %559 = vmatpush1.xpose.msra.mxu0 %v496
        %560 = vmatprep.subr.mxu0 0.0
        %561 = vmatpush2.xpose.msra.mxu0 0.0
        %562 = vmatprep.subr.mxu0 0.0
        %563 = vmatpush2.xpose.msra.mxu0 0.0
        %564 = vmatprep.subr.mxu0 0.0
        %565 = vmatpush2.xpose.msra.mxu0 0.0
        %566 = vmatprep.subr.mxu0 0.0
        %567 = vmatpush2.xpose.msra.mxu0 0.0
        %568 = vmatprep.subr.mxu0 0.0
        %569 = vmatpush2.xpose.msra.mxu0 0.0
        %570 = vmatprep.subr.mxu0 0.0
        %571 = vmatpush2.xpose.msra.mxu0 0.0
        %572 = vmatprep.subr.mxu0 0.0
        %573 = vmatpush2.xpose.msra.mxu0 0.0
        %574 = vmatprep.subr.mxu0 0.0
        %575 = vmatpush2.xpose.msra.mxu0 0.0
        %576 = vmatprep.subr.mxu0 0.0
        %577 = vmatpush2.xpose.msra.mxu0 0.0
        %578 = vmatprep.subr.mxu0 0.0
        %579 = vmatpush2.xpose.msra.mxu0 0.0
        %580 = vmatprep.subr.mxu0 0.0
        %581 = vmatpush2.xpose.msra.mxu0 0.0
        %582 = vmatprep.subr.mxu0 0.0
        %583 = vmatpush2.xpose.msra.mxu0 0.0
        %584 = vmatprep.subr.mxu0 0.0
        %585 = vmatpush2.xpose.msra.mxu0 0.0
        %586 = vmatprep.subr.mxu0 0.0
        %587 = vmatpush2.xpose.msra.mxu0 0.0
        %588 = vmatprep.subr.mxu0 0.0
        %589 = vmatpush2.xpose.msra.mxu0 0.0
        %590 = vmatprep.subr.mxu0 0.0
        %591 = vmatpush2.xpose.msra.mxu0 0.0
        %592 = vmatprep.mubr.f32.mxu0 %v494
        %593 = vmatmul.mubr.f32.gmra.mxu0 %v493
        %v594 = vpop.f32.mrf.mxu0
        %v595 = vadd.f32 0.0, %v594
        %v596 = vpop.f32.mrf.mxu0
        %597 = vdwg.mxu0
        %v598 = vadd.f32 %v495, %v595
        %599 = vst [vmem:[#allocation2] sm:$0xff] %v598
        // Predicated region
        $region65: #{tpu_custom_call.1} parent=47 // pred_check
          %p600 = pneg %p372
        $region66: #{tpu_custom_call.1} parent=47 // pred_check_branch
          %602 = sbr.rel (%p600) target = $region68
        $region67: #{tpu_custom_call.1} parent=47 // pred_region
          %v603 = vld [vmem:[#allocation2] sm:$0xff]
          %v604 = vld [vmem:[%s4] sm:$0x1]
          %v606 = vlaneseq
          %v607 = vshrl.u32 %v606, 7
          %v608 = vsub.s32 0, %v607
          %v609 = vrot.slane %v604, %v608
          %v611 = vadd.f32 %v603, %v609
          %v612 = vadd.f32 %v611, %v377
          %613 = vadd.xlane.f32.xlu0 %v612
          %v614 = vpop.xlane.xlu0 %613
          %v615 = vmul.f32 %v614, 0.0078125
          %v616 = vmul.f32 %v612, %v612
          %617 = vadd.xlane.f32.xlu0 %v616
          %v618 = vpop.xlane.xlu0 %617
          %v619 = vmul.f32 %v618, 0.0078125
          %v620 = vmul.f32 %v615, %v615
          %v621 = vsub.f32 %v619, %v620
          %v622 = vmax.f32 %v621, 0.0
          %v623 = vsub.f32 %v612, %v615
          %v624 = vadd.f32 %v622, 1e-05
          %v625 = vrsqrt.pop %v624
          %v626 = vmul.f32 %v623, %v625
          %v627 = vld [vmem:[%s5] sm:$0x1]
          %v629 = vlaneseq
          %v630 = vshrl.u32 %v629, 7
          %v631 = vsub.s32 0, %v630
          %v632 = vrot.slane %v627, %v631
          %v634 = vmul.f32 %v626, %v632
          %v635 = vld [vmem:[%s6] sm:$0x1]
          %v637 = vlaneseq
          %v638 = vshrl.u32 %v637, 7
          %v639 = vsub.s32 0, %v638
          %v640 = vrot.slane %v635, %v639
          %v642 = vadd.f32 %v634, %v640
          %643 = vst [vmem:[%s364] sm:$0xff] %v642
        $region68: #{tpu_custom_call.1} parent=47 // pred_fallthru
          _
        %s644 = sand.u32 %s212, 1
        %s645 = scalar_lea.sflag [#allocation5], %s644
        %s646 = sand.u32 %s212, 1
        %s647 = smul.addr %s646, 8
        %s648 = scalar_lea.vmem [#allocation9], %s647
        // Predicated region
        $region69: #{tpu_custom_call.1} parent=47 // pred_check
          %p649 = pneg %p222
        $region70: #{tpu_custom_call.1} parent=47 // pred_check_branch
          %651 = sbr.rel (%p649) target = $region72
        $region71: #{tpu_custom_call.1} parent=47 // pred_region
          %s653 = ssub.s32 128, 128
          %654 = vsyncadd %s645, %s653
          %s655 = smul.addr %s29, 128
          %s656 = scalar_lea.hbm %s7, %s655
          %s658 = sshll.u32 %s648, 4
          %s659 = int_to_ptr.vmem [resolvable:$true] %s658
          %661 = dma.vmem_to_hbm [thread:$0]  %s659, 128, %s656, %s645
        $region72: #{tpu_custom_call.1} parent=47 // pred_fallthru
          _
      $region48: #{tpu_custom_call.1} parent=5 // pred_fallthru
        _
      %p662 = scmp.le.s32.totalorder 2, %s20
      // Predicated region
      $region73: #{tpu_custom_call.1} parent=5 // pred_check
        %p663 = pneg %p662
      $region74: #{tpu_custom_call.1} parent=5 // pred_check_branch
        %665 = sbr.rel (%p663) target = $region76
      $region75: #{tpu_custom_call.1} parent=5 // pred_region
        %s666 = ssub.s32 %s20, 2
        // Predicated region
        $region77: #{tpu_custom_call.1} parent=75 // pred_check
          %p667 = pneg %p228
        $region78: #{tpu_custom_call.1} parent=75 // pred_check_branch
          %669 = sbr.rel (%p667) target = $region80
        $region79: #{tpu_custom_call.1} parent=75 // pred_region
          %s670 = sand.u32 %s213, 1
          %s671 = scalar_lea.sflag [#allocation5], %s670
          %s672 = sand.u32 %s213, 1
          %s673 = smul.addr %s672, 8
          %s674 = scalar_lea.vmem [#allocation9], %s673
          %675 = dma.done %s671, 128
        $region80: #{tpu_custom_call.1} parent=75 // pred_fallthru
          _
      $region76: #{tpu_custom_call.1} parent=5 // pred_fallthru
        _
    $region6: #{tpu_custom_call.1} parent=1 // loop_footer
      %s24 = sadd.s32 1, %s20
    $region7: #{tpu_custom_call.1} parent=1 // loop_footer_branch
      %19 = sbr.rel target = $region3
    $region8: #{tpu_custom_call.1} parent=1 // loop_exit
      _
    %676 = vsyncpa [#allocation4], 1
    %s677 = scalar_lea.sflag [#allocation4], 1
    %678 = vsyncpa %s677, 1
    %679 = vsyncpa [#allocation7], 1
    %680 = vsyncpa [#allocation5], 1
    %s681 = scalar_lea.sflag [#allocation5], 1
    %682 = vsyncpa %s681, 1

// kernel: tpu_custom_call.1
$region0: #{tpu_custom_call.1}
  #allocation0 [shape = 'u32[]', space=smem, size = 0x4, offset = 0x4, fixed_abs, tag = 'smem constant byte address 0x4 - core index']
  #allocation1 [shape = 'u32[144,128]{1,0:T(1,128)}', space=vmem, size = 0x12000, scoped, tag = 'internal scratch']
  #allocation2 [shape = 'f32[8,128]{1,0:T(8,128)}', space=vmem, size = 0x1000, scoped, tag = 'scratch operand']
  %s0 = inlined_call_operand.hbm [shape: f32[16,128], index: 0, kind: input, shape index: {}]
  %s1 = inlined_call_operand.hbm [shape: f32[256,128], index: 1, kind: input, shape index: {}]
  %s2 = inlined_call_operand.vmem [shape: f32[1,256], index: 2, kind: input, shape index: {}]
  %s3 = inlined_call_operand.hbm [shape: f32[128,256], index: 3, kind: input, shape index: {}]
  %s4 = inlined_call_operand.vmem [shape: f32[1,128], index: 4, kind: input, shape index: {}]
  %s5 = inlined_call_operand.vmem [shape: f32[1,128], index: 5, kind: input, shape index: {}]
  %s6 = inlined_call_operand.vmem [shape: f32[1,128], index: 6, kind: input, shape index: {}]
  %s7 = inlined_call_operand.hbm [shape: f32[16,128], index: 7, kind: output, shape index: {}]
  %s8 = sld [smem:[#allocation0]]
  $region81: #{tpu_custom_call.1} parent=0
    _
  %s10 = ssub.s32 1, %s8
  %s11 = scalar_select 0, %s10, %s8
  $region1: #{tpu_custom_call.1} parent=0
    #allocation3 [shape = 'u8[8192]{0}', space=vmem, size = 0x2000, scoped, tag = 'input window, operand 0']
    #allocation4 [shape = 's32[2]{0}', space=sflag, size = 0x8, scoped, tag = 'scoped memory for tpu_custom_call.1']
    #allocation5 [shape = 's32[2]{0}', space=sflag, size = 0x8, scoped, tag = 'scoped memory for tpu_custom_call.1']
    #allocation6 [shape = 'u8[131072]{0}', space=vmem, size = 0x20000, scoped, tag = 'input window, operand 1, single buffered']
    #allocation7 [shape = 's32[1]{0}', space=sflag, size = 0x4, scoped, tag = 'scoped memory for tpu_custom_call.1']
    #allocation8 [shape = 'u8[131072]{0}', space=vmem, size = 0x20000, scoped, tag = 'input window, operand 3, single buffered']
    #allocation9 [shape = 'u8[8192]{0}', space=vmem, size = 0x2000, scoped, tag = 'output window, operand 0']
    %12 = vsyncpa [#allocation4], 0
    %s13 = scalar_lea.sflag [#allocation4], 1
    %14 = vsyncpa %s13, 0
    %15 = vsyncpa [#allocation7], 0
    %16 = vsyncpa [#allocation5], 0
    %s17 = scalar_lea.sflag [#allocation5], 1
    %18 = vsyncpa %s17, 0
    loop: start=0, step=1, limit=4
    $region2: #{tpu_custom_call.1} parent=1 // loop_pre_header
      _
    $region3: #{tpu_custom_call.1} parent=1 // loop_header
      %s20 = sphi 0, %s24
      %p21 = scmp.ge.s32.totalorder %s20, 4
      %s27 = sphi 0, %s39
      %s28 = sphi 0, %s35
      %s29 = sphi 0, %s27
      %s30 = sphi 0, %s28
      %s31 = sphi 0, %s29
      %s32 = sphi 0, %s30
      %s42 = sphi 0, %s44
      %s45 = sphi 0, %s42
      %s46 = sphi 0, %s45
      %s62 = sphi 0, %s46
      %s68 = sphi 0, %s70
      %s71 = sphi 0, %s68
      %s72 = sphi 0, %s71
      %s88 = sphi 0, %s72
      %s94 = sphi 0, %s96
      %s97 = sphi 0, %s94
      %s98 = sphi 0, %s97
      %s114 = sphi 0, %s98
      %s120 = sphi 0, %s122
      %s123 = sphi 0, %s120
      %s124 = sphi 0, %s123
      %s140 = sphi 0, %s124
      %s144 = sphi 0, %s144
      %s146 = sphi 0, %s144
      %s147 = sphi 0, %s146
      %s161 = sphi 0, %s147
      %s165 = sphi 0, %s165
      %s167 = sphi 0, %s165
      %s168 = sphi 0, %s167
      %s182 = sphi 0, %s168
      %s186 = sphi 0, %s186
      %s188 = sphi 0, %s186
      %s189 = sphi 0, %s188
      %s203 = sphi 0, %s189
      %s209 = sphi 0, %s211
      %s212 = sphi 0, %s209
      %s213 = sphi 0, %s212
      %s229 = sphi 0, %s213
    $region4: #{tpu_custom_call.1} parent=1 // loop_header_branch
      %23 = sbr.rel (%p21) target = $region8
    $region5: #{tpu_custom_call.1} parent=1 // loop_body
      %s25 = ssub.s32 %s20, 1
      %s26 = ssub.s32 %s20, 2
      %s33 = sadd.s32 1, %s28
      %p34 = scmp.ge.s32.totalorder %s33, 1
      %s35 = scalar_select %p34, 0, %s33
      %s36 = sadd.s32 1, %s27
      %s37 = scalar_select %p34, %s36, %s27
      %p38 = scmp.ge.s32.totalorder %s37, 2
      %s39 = scalar_select %p38, 0, %s37
      %s40 = ssub.s32 %s27, %s39
      %p41 = scmp.eq.s32.totalorder %s40, 0
      %s43 = sadd.s32 %s42, 1
      %s44 = scalar_select %p41, %s42, %s43
      %p47 = pneg %p41
      %p48 = scmp.eq.s32.totalorder %s20, 1
      %p49 = por %p47, %p48
      %p50 = scmp.ne.s32.totalorder %s42, %s45
      %p51 = scmp.eq.s32.totalorder %s20, 0
      %p52 = por %p50, %p51
      %p53 = scmp.ne.s32.totalorder %s42, %s45
      %p54 = scmp.eq.s32.totalorder %s25, 1
      %p55 = por %p53, %p54
      %p56 = scmp.ne.s32.totalorder %s45, %s46
      %p57 = scmp.eq.s32.totalorder %s25, 0
      %p58 = por %p56, %p57
      %p59 = scmp.ne.s32.totalorder %s45, %s46
      %p60 = scmp.eq.s32.totalorder %s26, 1
      %p61 = por %p59, %p60
      %p63 = scmp.ne.s32.totalorder %s46, %s62
      %p64 = scmp.eq.s32.totalorder %s26, 0
      %p65 = por %p63, %p64
      %s66 = ssub.s32 %s28, %s35
      %p67 = scmp.eq.s32.totalorder %s66, 0
      %s69 = sadd.s32 %s68, 1
      %s70 = scalar_select %p67, %s68, %s69
      %p73 = pneg %p67
      %p74 = scmp.eq.s32.totalorder %s20, 1
      %p75 = por %p73, %p74
      %p76 = scmp.ne.s32.totalorder %s68, %s71
      %p77 = scmp.eq.s32.totalorder %s20, 0
      %p78 = por %p76, %p77
      %p79 = scmp.ne.s32.totalorder %s68, %s71
      %p80 = scmp.eq.s32.totalorder %s25, 1
      %p81 = por %p79, %p80
      %p82 = scmp.ne.s32.totalorder %s71, %s72
      %p83 = scmp.eq.s32.totalorder %s25, 0
      %p84 = por %p82, %p83
      %p85 = scmp.ne.s32.totalorder %s71, %s72
      %p86 = scmp.eq.s32.totalorder %s26, 1
      %p87 = por %p85, %p86
      %p89 = scmp.ne.s32.totalorder %s72, %s88
      %p90 = scmp.eq.s32.totalorder %s26, 0
      %p91 = por %p89, %p90
      %s92 = ssub.s32 %s28, %s35
      %p93 = scmp.eq.s32.totalorder %s92, 0
      %s95 = sadd.s32 %s94, 1
      %s96 = scalar_select %p93, %s94, %s95
      %p99 = pneg %p93
      %p100 = scmp.eq.s32.totalorder %s20, 1
      %p101 = por %p99, %p100
      %p102 = scmp.ne.s32.totalorder %s94, %s97
      %p103 = scmp.eq.s32.totalorder %s20, 0
      %p104 = por %p102, %p103
      %p105 = scmp.ne.s32.totalorder %s94, %s97
      %p106 = scmp.eq.s32.totalorder %s25, 1
      %p107 = por %p105, %p106
      %p108 = scmp.ne.s32.totalorder %s97, %s98
      %p109 = scmp.eq.s32.totalorder %s25, 0
      %p110 = por %p108, %p109
      %p111 = scmp.ne.s32.totalorder %s97, %s98
      %p112 = scmp.eq.s32.totalorder %s26, 1
      %p113 = por %p111, %p112
      %p115 = scmp.ne.s32.totalorder %s98, %s114
      %p116 = scmp.eq.s32.totalorder %s26, 0
      %p117 = por %p115, %p116
      %s118 = ssub.s32 %s28, %s35
      %p119 = scmp.eq.s32.totalorder %s118, 0
      %s121 = sadd.s32 %s120, 1
      %s122 = scalar_select %p119, %s120, %s121
      %p125 = pneg %p119
      %p126 = scmp.eq.s32.totalorder %s20, 1
      %p127 = por %p125, %p126
      %p128 = scmp.ne.s32.totalorder %s120, %s123
      %p129 = scmp.eq.s32.totalorder %s20, 0
      %p130 = por %p128, %p129
      %p131 = scmp.ne.s32.totalorder %s120, %s123
      %p132 = scmp.eq.s32.totalorder %s25, 1
      %p133 = por %p131, %p132
      %p134 = scmp.ne.s32.totalorder %s123, %s124
      %p135 = scmp.eq.s32.totalorder %s25, 0
      %p136 = por %p134, %p135
      %p137 = scmp.ne.s32.totalorder %s123, %s124
      %p138 = scmp.eq.s32.totalorder %s26, 1
      %p139 = por %p137, %p138
      %p141 = scmp.ne.s32.totalorder %s124, %s140
      %p142 = scmp.eq.s32.totalorder %s26, 0
      %p143 = por %p141, %p142
      %s145 = sadd.s32 %s144, 1
      %p148 = scmp.eq.s32.totalorder %s20, 1
      %p149 = scmp.ne.s32.totalorder %s144, %s146
      %p150 = scmp.eq.s32.totalorder %s20, 0
      %p151 = por %p149, %p150
      %p152 = scmp.ne.s32.totalorder %s144, %s146
      %p153 = scmp.eq.s32.totalorder %s25, 1
      %p154 = por %p152, %p153
      %p155 = scmp.ne.s32.totalorder %s146, %s147
      %p156 = scmp.eq.s32.totalorder %s25, 0
      %p157 = por %p155, %p156
      %p158 = scmp.ne.s32.totalorder %s146, %s147
      %p159 = scmp.eq.s32.totalorder %s26, 1
      %p160 = por %p158, %p159
      %p162 = scmp.ne.s32.totalorder %s147, %s161
      %p163 = scmp.eq.s32.totalorder %s26, 0
      %p164 = por %p162, %p163
      %s166 = sadd.s32 %s165, 1
      %p169 = scmp.eq.s32.totalorder %s20, 1
      %p170 = scmp.ne.s32.totalorder %s165, %s167
      %p171 = scmp.eq.s32.totalorder %s20, 0
      %p172 = por %p170, %p171
      %p173 = scmp.ne.s32.totalorder %s165, %s167
      %p174 = scmp.eq.s32.totalorder %s25, 1
      %p175 = por %p173, %p174
      %p176 = scmp.ne.s32.totalorder %s167, %s168
      %p177 = scmp.eq.s32.totalorder %s25, 0
      %p178 = por %p176, %p177
      %p179 = scmp.ne.s32.totalorder %s167, %s168
      %p180 = scmp.eq.s32.totalorder %s26, 1
      %p181 = por %p179, %p180
      %p183 = scmp.ne.s32.totalorder %s168, %s182
      %p184 = scmp.eq.s32.totalorder %s26, 0
      %p185 = por %p183, %p184
      %s187 = sadd.s32 %s186, 1
      %p190 = scmp.eq.s32.totalorder %s20, 1
      %p191 = scmp.ne.s32.totalorder %s186, %s188
      %p192 = scmp.eq.s32.totalorder %s20, 0
      %p193 = por %p191, %p192
      %p194 = scmp.ne.s32.totalorder %s186, %s188
      %p195 = scmp.eq.s32.totalorder %s25, 1
      %p196 = por %p194, %p195
      %p197 = scmp.ne.s32.totalorder %s188, %s189
      %p198 = scmp.eq.s32.totalorder %s25, 0
      %p199 = por %p197, %p198
      %p200 = scmp.ne.s32.totalorder %s188, %s189
      %p201 = scmp.eq.s32.totalorder %s26, 1
      %p202 = por %p200, %p201
      %p204 = scmp.ne.s32.totalorder %s189, %s203
      %p205 = scmp.eq.s32.totalorder %s26, 0
      %p206 = por %p204, %p205
      %s207 = ssub.s32 %s27, %s39
      %p208 = scmp.eq.s32.totalorder %s207, 0
      %s210 = sadd.s32 %s209, 1
      %s211 = scalar_select %p208, %s209, %s210
      %p214 = pneg %p208
      %p215 = scmp.eq.s32.totalorder %s20, 1
      %p216 = por %p214, %p215
      %p217 = scmp.ne.s32.totalorder %s209, %s212
      %p218 = scmp.eq.s32.totalorder %s20, 0
      %p219 = por %p217, %p218
      %p220 = scmp.ne.s32.totalorder %s209, %s212
      %p221 = scmp.eq.s32.totalorder %s25, 1
      %p222 = por %p220, %p221
      %p223 = scmp.ne.s32.totalorder %s212, %s213
      %p224 = scmp.eq.s32.totalorder %s25, 0
      %p225 = por %p223, %p224
      %p226 = scmp.ne.s32.totalorder %s212, %s213
      %p227 = scmp.eq.s32.totalorder %s26, 1
      %p228 = por %p226, %p227
      %p230 = scmp.ne.s32.totalorder %s213, %s229
      %p231 = scmp.eq.s32.totalorder %s26, 0
      %p232 = por %p230, %p231
      %p233 = scmp.le.s32.totalorder 1, %s20
      %p234 = scmp.lt.s32.totalorder %s20, 3
      %p235 = pnand %p233, %p234
      %p236 = pneg %p235
      // Predicated region
      $region9: #{tpu_custom_call.1} parent=5 // pred_check
        _
      $region10: #{tpu_custom_call.1} parent=5 // pred_check_branch
        %238 = sbr.rel (%p235) target = $region12
      $region11: #{tpu_custom_call.1} parent=5 // pred_region
        %s239 = ssub.s32 %s20, 1
        // Predicated region
        $region13: #{tpu_custom_call.1} parent=11 // pred_check
          %p240 = pneg %p84
        $region14: #{tpu_custom_call.1} parent=11 // pred_check_branch
          %242 = sbr.rel (%p240) target = $region16
        $region15: #{tpu_custom_call.1} parent=11 // pred_region
          %s243 = smul.u32 32, %s30
          %s245 = ssub.s32 4096, 4096
          %246 = vsyncadd [#allocation7], %s245
          %s247 = smul.addr %s243, 128
          %s248 = scalar_lea.hbm %s1, %s247
          %s249 = sshll.u32 [#allocation6], 4
          %s250 = int_to_ptr.vmem [resolvable:$true] %s249
          %255 = dma.hbm_to_vmem [thread:$0]  %s248, 4096, %s250, [#allocation7], 128, 128, 8
        $region16: #{tpu_custom_call.1} parent=11 // pred_fallthru
          _
        // Predicated region
        $region17: #{tpu_custom_call.1} parent=11 // pred_check
          %p256 = pneg %p110
        $region18: #{tpu_custom_call.1} parent=11 // pred_check_branch
          %258 = sbr.rel (%p256) target = $region20
        $region19: #{tpu_custom_call.1} parent=11 // pred_region
          %s259 = smul.u32 2, %s30
          %p260 = scmp.lt.s32.totalorder %s259, 1
          %s261 = scalar_select %p260, %s259, 1
          %s262 = scalar_lea.vmem %s2, %s261
          %s263 = smul.u32 2, %s30
        $region20: #{tpu_custom_call.1} parent=11 // pred_fallthru
          _
        // Predicated region
        $region21: #{tpu_custom_call.1} parent=11 // pred_check
          %p264 = pneg %p136
        $region22: #{tpu_custom_call.1} parent=11 // pred_check_branch
          %266 = sbr.rel (%p264) target = $region24
        $region23: #{tpu_custom_call.1} parent=11 // pred_region
          %s267 = smul.u32 2, %s30
          %s269 = ssub.s32 4096, 4096
          %270 = vsyncadd [#allocation7], %s269
          %s271 = smul.addr %s267, 128
          %s272 = scalar_lea.hbm %s3, %s271
          %s273 = sshll.u32 [#allocation8], 4
          %s274 = int_to_ptr.vmem [resolvable:$true] %s273
          %279 = dma.hbm_to_vmem [thread:$0]  %s272, 4096, %s274, [#allocation7], 256, 256, 16
        $region24: #{tpu_custom_call.1} parent=11 // pred_fallthru
          _
        // Predicated region
        $region25: #{tpu_custom_call.1} parent=11 // pred_check
          %p280 = pneg %p157
        $region26: #{tpu_custom_call.1} parent=11 // pred_check_branch
          %282 = sbr.rel (%p280) target = $region28
        $region27: #{tpu_custom_call.1} parent=11 // pred_region
          _
        $region28: #{tpu_custom_call.1} parent=11 // pred_fallthru
          _
        // Predicated region
        $region29: #{tpu_custom_call.1} parent=11 // pred_check
          %p283 = pneg %p178
        $region30: #{tpu_custom_call.1} parent=11 // pred_check_branch
          %285 = sbr.rel (%p283) target = $region32
        $region31: #{tpu_custom_call.1} parent=11 // pred_region
          _
        $region32: #{tpu_custom_call.1} parent=11 // pred_fallthru
          _
        // Predicated region
        $region33: #{tpu_custom_call.1} parent=11 // pred_check
          %p286 = pneg %p199
        $region34: #{tpu_custom_call.1} parent=11 // pred_check_branch
          %288 = sbr.rel (%p286) target = $region36
        $region35: #{tpu_custom_call.1} parent=11 // pred_region
          _
        $region36: #{tpu_custom_call.1} parent=11 // pred_fallthru
          _
      $region12: #{tpu_custom_call.1} parent=5 // pred_fallthru
        _
      %p289 = scmp.lt.s32.totalorder %s20, 2
      // Predicated region
      $region37: #{tpu_custom_call.1} parent=5 // pred_check
        %p290 = pneg %p289
      $region38: #{tpu_custom_call.1} parent=5 // pred_check_branch
        %292 = sbr.rel (%p290) target = $region40
      $region39: #{tpu_custom_call.1} parent=5 // pred_region
        // Predicated region
        $region41: #{tpu_custom_call.1} parent=39 // pred_check
          %p293 = pneg %p52
        $region42: #{tpu_custom_call.1} parent=39 // pred_check_branch
          %295 = sbr.rel (%p293) target = $region44
        $region43: #{tpu_custom_call.1} parent=39 // pred_region
          %s296 = sand.u32 %s42, 1
          %s297 = scalar_lea.sflag [#allocation4], %s296
          %s298 = sand.u32 %s42, 1
          %s299 = smul.addr %s298, 8
          %s300 = scalar_lea.vmem [#allocation3], %s299
          %s302 = ssub.s32 128, 128
          %303 = vsyncadd %s297, %s302
          %s304 = smul.addr %s27, 128
          %s305 = scalar_lea.hbm %s0, %s304
          %s307 = sshll.u32 %s300, 4
          %s308 = int_to_ptr.vmem [resolvable:$true] %s307
          %310 = dma.hbm_to_vmem [thread:$0]  %s305, 128, %s308, %s297
        $region44: #{tpu_custom_call.1} parent=39 // pred_fallthru
          _
      $region40: #{tpu_custom_call.1} parent=5 // pred_fallthru
        _
      %p311 = scmp.le.s32.totalorder 1, %s20
      %p312 = scmp.lt.s32.totalorder %s20, 3
      %p313 = pnand %p311, %p312
      %p314 = pneg %p313
      // Predicated region
      $region45: #{tpu_custom_call.1} parent=5 // pred_check
        _
      $region46: #{tpu_custom_call.1} parent=5 // pred_check_branch
        %316 = sbr.rel (%p313) target = $region48
      $region47: #{tpu_custom_call.1} parent=5 // pred_region
        %s317 = ssub.s32 %s20, 1
        %s318 = sand.u32 %s45, 1
        %s319 = scalar_lea.sflag [#allocation4], %s318
        %s320 = sand.u32 %s45, 1
        %s321 = smul.addr %s320, 8
        %s322 = scalar_lea.vmem [#allocation3], %s321
        // Predicated region
        $region49: #{tpu_custom_call.1} parent=47 // pred_check
          %p323 = pneg %p58
        $region50: #{tpu_custom_call.1} parent=47 // pred_check_branch
          %325 = sbr.rel (%p323) target = $region52
        $region51: #{tpu_custom_call.1} parent=47 // pred_region
          %326 = dma.done %s319, 128
        $region52: #{tpu_custom_call.1} parent=47 // pred_fallthru
          _
        // Predicated region
        $region53: #{tpu_custom_call.1} parent=47 // pred_check
          %p327 = pneg %p84
        $region54: #{tpu_custom_call.1} parent=47 // pred_check_branch
          %329 = sbr.rel (%p327) target = $region56
        $region55: #{tpu_custom_call.1} parent=47 // pred_region
          %330 = dma.done [#allocation7], 4096
        $region56: #{tpu_custom_call.1} parent=47 // pred_fallthru
          _
        // Predicated region
        $region57: #{tpu_custom_call.1} parent=47 // pred_check
          %p331 = pneg %p136
        $region58: #{tpu_custom_call.1} parent=47 // pred_check_branch
          %333 = sbr.rel (%p331) target = $region60
        $region59: #{tpu_custom_call.1} parent=47 // pred_region
          %334 = dma.done [#allocation7], 4096
        $region60: #{tpu_custom_call.1} parent=47 // pred_fallthru
          _
        %s335 = sand.u32 %s45, 1
        %s336 = scalar_lea.sflag [#allocation4], %s335
        %s337 = sand.u32 %s45, 1
        %s338 = smul.addr %s337, 8
        %s339 = scalar_lea.vmem [#allocation3], %s338
        %p340 = pneg %p58
        %p341 = pneg %p55
        %p342 = pneg %p84
        %p343 = pneg %p81
        %s344 = smul.u32 2, %s30
        %p345 = scmp.lt.s32.totalorder %s344, 1
        %s346 = scalar_select %p345, %s344, 1
        %s347 = scalar_lea.vmem %s2, %s346
        %p348 = pneg %p110
        %p349 = pneg %p107
        %p350 = pneg %p136
        %p351 = pneg %p133
        %p352 = pneg %p157
        %p353 = pneg %p154
        %p354 = pneg %p178
        %p355 = pneg %p175
        %p356 = pneg %p199
        %p357 = pneg %p196
        %p358 = pneg %p225
        %p359 = pneg %p222
        %s360 = sand.u32 %s212, 1
        %s361 = scalar_lea.sflag [#allocation5], %s360
        %s362 = sand.u32 %s212, 1
        %s363 = smul.addr %s362, 8
        %s364 = scalar_lea.vmem [#allocation9], %s363
        %s365 = smul.u32 32, %s30
        %s366 = smul.u32 2, %s30
        %p367 = scmp.lt.s32.totalorder %s366, 1
        %s368 = scalar_select %p367, %s366, 1
        %s369 = scalar_lea.vmem %s2, %s368
        %s370 = smul.u32 2, %s30
        %s371 = smul.u32 2, %s30
        %p372 = scmp.eq.s32.totalorder %s30, 0
        // Predicated region
        $region61: #{tpu_custom_call.1} parent=47 // pred_check
          %p373 = pneg %p372
        $region62: #{tpu_custom_call.1} parent=47 // pred_check_branch
          %375 = sbr.rel (%p373) target = $region64
        $region63: #{tpu_custom_call.1} parent=47 // pred_region
          %376 = vst [vmem:[#allocation2] sm:$0xff] 0.0
        $region64: #{tpu_custom_call.1} parent=47 // pred_fallthru
          _
        %v377 = vld [vmem:[%s322] sm:$0xff]
        %v378 = vld [vmem:[#allocation6] sm:$0xff]
        %v379 = vld [vmem:[#allocation6 + $0x8] sm:$0xff]
        %v380 = vld [vmem:[#allocation6 + $0x10] sm:$0xff]
        %v381 = vld [vmem:[#allocation6 + $0x18] sm:$0xff]
        %v382 = vld [vmem:[#allocation6 + $0x20] sm:$0xff]
        %v383 = vld [vmem:[#allocation6 + $0x28] sm:$0xff]
        %v384 = vld [vmem:[#allocation6 + $0x30] sm:$0xff]
        %v385 = vld [vmem:[#allocation6 + $0x38] sm:$0xff]
        %v386 = vld [vmem:[#allocation6 + $0x40] sm:$0xff]
        %v387 = vld [vmem:[#allocation6 + $0x48] sm:$0xff]
        %v388 = vld [vmem:[#allocation6 + $0x50] sm:$0xff]
        %v389 = vld [vmem:[#allocation6 + $0x58] sm:$0xff]
        %v390 = vld [vmem:[#allocation6 + $0x60] sm:$0xff]
        %v391 = vld [vmem:[#allocation6 + $0x68] sm:$0xff]
        %v392 = vld [vmem:[#allocation6 + $0x70] sm:$0xff]
        %v393 = vld [vmem:[#allocation6 + $0x78] sm:$0xff]
        %v394 = vld [vmem:[#allocation6 + $0x80] sm:$0xff]
        %v395 = vld [vmem:[#allocation6 + $0x88] sm:$0xff]
        %v396 = vld [vmem:[#allocation6 + $0x90] sm:$0xff]
        %v397 = vld [vmem:[#allocation6 + $0x98] sm:$0xff]
        %v398 = vld [vmem:[#allocation6 + $0xa0] sm:$0xff]
        %v399 = vld [vmem:[#allocation6 + $0xa8] sm:$0xff]
        %v400 = vld [vmem:[#allocation6 + $0xb0] sm:$0xff]
        %v401 = vld [vmem:[#allocation6 + $0xb8] sm:$0xff]
        %v402 = vld [vmem:[#allocation6 + $0xc0] sm:$0xff]
        %v403 = vld [vmem:[#allocation6 + $0xc8] sm:$0xff]
        %v404 = vld [vmem:[#allocation6 + $0xd0] sm:$0xff]
        %v405 = vld [vmem:[#allocation6 + $0xd8] sm:$0xff]
        %v406 = vld [vmem:[#allocation6 + $0xe0] sm:$0xff]
        %v407 = vld [vmem:[#allocation6 + $0xe8] sm:$0xff]
        %v408 = vld [vmem:[#allocation6 + $0xf0] sm:$0xff]
        %v409 = vld [vmem:[#allocation6 + $0xf8] sm:$0xff]
        %v410 = vld [vmem:[%s369] sm:$0x3]
        %v412 = vlaneseq
        %v413 = vshrl.u32 %v412, 7
        %v414 = vsub.s32 0, %v413
        %v415 = vrot.slane %v410, %v414
        %v416 = vlaneseq
        %v417 = vshrl.u32 %v416, 7
        %v418 = vsub.s32 1, %v417
        %v419 = vrot.slane %v410, %v418
        %422 = vmatprep.subr.mxu0 0.0
        %423 = vmatpush1.xpose.msra.mxu0 %v393
        %424 = vmatprep.subr.mxu0 0.0
        %425 = vmatpush1.xpose.msra.mxu0 %v392
        %426 = vmatprep.subr.mxu0 0.0
        %427 = vmatpush1.xpose.msra.mxu0 %v391
        %428 = vmatprep.subr.mxu0 0.0
        %429 = vmatpush1.xpose.msra.mxu0 %v390
        %430 = vmatprep.subr.mxu0 0.0
        %431 = vmatpush1.xpose.msra.mxu0 %v389
        %432 = vmatprep.subr.mxu0 0.0
        %433 = vmatpush1.xpose.msra.mxu0 %v388
        %434 = vmatprep.subr.mxu0 0.0
        %435 = vmatpush1.xpose.msra.mxu0 %v387
        %436 = vmatprep.subr.mxu0 0.0
        %437 = vmatpush1.xpose.msra.mxu0 %v386
        %438 = vmatprep.subr.mxu0 0.0
        %439 = vmatpush1.xpose.msra.mxu0 %v385
        %440 = vmatprep.subr.mxu0 0.0
        %441 = vmatpush1.xpose.msra.mxu0 %v384
        %442 = vmatprep.subr.mxu0 0.0
        %443 = vmatpush1.xpose.msra.mxu0 %v383
        %444 = vmatprep.subr.mxu0 0.0
        %445 = vmatpush1.xpose.msra.mxu0 %v382
        %446 = vmatprep.subr.mxu0 0.0
        %447 = vmatpush1.xpose.msra.mxu0 %v381
        %448 = vmatprep.subr.mxu0 0.0
        %449 = vmatpush1.xpose.msra.mxu0 %v380
        %450 = vmatprep.subr.mxu0 0.0
        %451 = vmatpush1.xpose.msra.mxu0 %v379
        %452 = vmatprep.subr.mxu0 0.0
        %453 = vmatpush1.xpose.msra.mxu0 %v378
        %454 = vmatprep.subr.mxu0 0.0
        %455 = vmatpush2.xpose.msra.mxu0 %v409
        %456 = vmatprep.subr.mxu0 0.0
        %457 = vmatpush2.xpose.msra.mxu0 %v408
        %458 = vmatprep.subr.mxu0 0.0
        %459 = vmatpush2.xpose.msra.mxu0 %v407
        %460 = vmatprep.subr.mxu0 0.0
        %461 = vmatpush2.xpose.msra.mxu0 %v406
        %462 = vmatprep.subr.mxu0 0.0
        %463 = vmatpush2.xpose.msra.mxu0 %v405
        %464 = vmatprep.subr.mxu0 0.0
        %465 = vmatpush2.xpose.msra.mxu0 %v404
        %466 = vmatprep.subr.mxu0 0.0
        %467 = vmatpush2.xpose.msra.mxu0 %v403
        %468 = vmatprep.subr.mxu0 0.0
        %469 = vmatpush2.xpose.msra.mxu0 %v402
        %470 = vmatprep.subr.mxu0 0.0
        %471 = vmatpush2.xpose.msra.mxu0 %v401
        %472 = vmatprep.subr.mxu0 0.0
        %473 = vmatpush2.xpose.msra.mxu0 %v400
        %474 = vmatprep.subr.mxu0 0.0
        %475 = vmatpush2.xpose.msra.mxu0 %v399
        %476 = vmatprep.subr.mxu0 0.0
        %477 = vmatpush2.xpose.msra.mxu0 %v398
        %478 = vmatprep.subr.mxu0 0.0
        %479 = vmatpush2.xpose.msra.mxu0 %v397
        %480 = vmatprep.subr.mxu0 0.0
        %481 = vmatpush2.xpose.msra.mxu0 %v396
        %482 = vmatprep.subr.mxu0 0.0
        %483 = vmatpush2.xpose.msra.mxu0 %v395
        %484 = vmatprep.subr.mxu0 0.0
        %485 = vmatpush2.xpose.msra.mxu0 %v394
        %486 = vmatprep.mubr.f32.mxu0 0.0
        %487 = vmatmul.mubr.f32.gmra.mxu0 %v377
        %v488 = vpop.f32.mrf.mxu0
        %v489 = vadd.f32 %v415, %v488
        %v490 = vpop.f32.mrf.mxu0
        %v491 = vadd.f32 %v419, %v490
        %492 = vdwg.mxu0
        %v493 = vmax.f32 %v489, 0.0
        %v494 = vmax.f32 %v491, 0.0
        %v495 = vld [vmem:[#allocation2] sm:$0xff]
        %v496 = vld [vmem:[#allocation8] sm:$0xff]
        %v497 = vld [vmem:[#allocation8 + $0x8] sm:$0xff]
        %v498 = vld [vmem:[#allocation8 + $0x10] sm:$0xff]
        %v499 = vld [vmem:[#allocation8 + $0x18] sm:$0xff]
        %v500 = vld [vmem:[#allocation8 + $0x20] sm:$0xff]
        %v501 = vld [vmem:[#allocation8 + $0x28] sm:$0xff]
        %v502 = vld [vmem:[#allocation8 + $0x30] sm:$0xff]
        %v503 = vld [vmem:[#allocation8 + $0x38] sm:$0xff]
        %v504 = vld [vmem:[#allocation8 + $0x40] sm:$0xff]
        %v505 = vld [vmem:[#allocation8 + $0x48] sm:$0xff]
        %v506 = vld [vmem:[#allocation8 + $0x50] sm:$0xff]
        %v507 = vld [vmem:[#allocation8 + $0x58] sm:$0xff]
        %v508 = vld [vmem:[#allocation8 + $0x60] sm:$0xff]
        %v509 = vld [vmem:[#allocation8 + $0x68] sm:$0xff]
        %v510 = vld [vmem:[#allocation8 + $0x70] sm:$0xff]
        %v511 = vld [vmem:[#allocation8 + $0x78] sm:$0xff]
        %v512 = vld [vmem:[#allocation8 + $0x80] sm:$0xff]
        %v513 = vld [vmem:[#allocation8 + $0x88] sm:$0xff]
        %v514 = vld [vmem:[#allocation8 + $0x90] sm:$0xff]
        %v515 = vld [vmem:[#allocation8 + $0x98] sm:$0xff]
        %v516 = vld [vmem:[#allocation8 + $0xa0] sm:$0xff]
        %v517 = vld [vmem:[#allocation8 + $0xa8] sm:$0xff]
        %v518 = vld [vmem:[#allocation8 + $0xb0] sm:$0xff]
        %v519 = vld [vmem:[#allocation8 + $0xb8] sm:$0xff]
        %v520 = vld [vmem:[#allocation8 + $0xc0] sm:$0xff]
        %v521 = vld [vmem:[#allocation8 + $0xc8] sm:$0xff]
        %v522 = vld [vmem:[#allocation8 + $0xd0] sm:$0xff]
        %v523 = vld [vmem:[#allocation8 + $0xd8] sm:$0xff]
        %v524 = vld [vmem:[#allocation8 + $0xe0] sm:$0xff]
        %v525 = vld [vmem:[#allocation8 + $0xe8] sm:$0xff]
        %v526 = vld [vmem:[#allocation8 + $0xf0] sm:$0xff]
        %v527 = vld [vmem:[#allocation8 + $0xf8] sm:$0xff]
        %528 = vmatprep.subr.mxu0 %v527
        %529 = vmatpush1.xpose.msra.mxu0 %v526
        %530 = vmatprep.subr.mxu0 %v525
        %531 = vmatpush1.xpose.msra.mxu0 %v524
        %532 = vmatprep.subr.mxu0 %v523
        %533 = vmatpush1.xpose.msra.mxu0 %v522
        %534 = vmatprep.subr.mxu0 %v521
        %535 = vmatpush1.xpose.msra.mxu0 %v520
        %536 = vmatprep.subr.mxu0 %v519
        %537 = vmatpush1.xpose.msra.mxu0 %v518
        %538 = vmatprep.subr.mxu0 %v517
        %539 = vmatpush1.xpose.msra.mxu0 %v516
        %540 = vmatprep.subr.mxu0 %v515
        %541 = vmatpush1.xpose.msra.mxu0 %v514
        %542 = vmatprep.subr.mxu0 %v513
        %543 = vmatpush1.xpose.msra.mxu0 %v512
        %544 = vmatprep.subr.mxu0 %v511
        %545 = vmatpush1.xpose.msra.mxu0 %v510
        %546 = vmatprep.subr.mxu0 %v509
        %547 = vmatpush1.xpose.msra.mxu0 %v508
        %548 = vmatprep.subr.mxu0 %v507
        %549 = vmatpush1.xpose.msra.mxu0 %v506
        %550 = vmatprep.subr.mxu0 %v505
        %551 = vmatpush1.xpose.msra.mxu0 %v504
        %552 = vmatprep.subr.mxu0 %v503
        %553 = vmatpush1.xpose.msra.mxu0 %v502
        %554 = vmatprep.subr.mxu0 %v501
        %555 = vmatpush1.xpose.msra.mxu0 %v500
        %556 = vmatprep.subr.mxu0 %v499
        %557 = vmatpush1.xpose.msra.mxu0 %v498
        %558 = vmatprep.subr.mxu0 %v497
        %559 = vmatpush1.xpose.msra.mxu0 %v496
        %560 = vmatprep.subr.mxu0 0.0
        %561 = vmatpush2.xpose.msra.mxu0 0.0
        %562 = vmatprep.subr.mxu0 0.0
        %563 = vmatpush2.xpose.msra.mxu0 0.0
        %564 = vmatprep.subr.mxu0 0.0
        %565 = vmatpush2.xpose.msra.mxu0 0.0
        %566 = vmatprep.subr.mxu0 0.0
        %567 = vmatpush2.xpose.msra.mxu0 0.0
        %568 = vmatprep.subr.mxu0 0.0
        %569 = vmatpush2.xpose.msra.mxu0 0.0
        %570 = vmatprep.subr.mxu0 0.0
        %571 = vmatpush2.xpose.msra.mxu0 0.0
        %572 = vmatprep.subr.mxu0 0.0
        %573 = vmatpush2.xpose.msra.mxu0 0.0
        %574 = vmatprep.subr.mxu0 0.0
        %575 = vmatpush2.xpose.msra.mxu0 0.0
        %576 = vmatprep.subr.mxu0 0.0
        %577 = vmatpush2.xpose.msra.mxu0 0.0
        %578 = vmatprep.subr.mxu0 0.0
        %579 = vmatpush2.xpose.msra.mxu0 0.0
        %580 = vmatprep.subr.mxu0 0.0
        %581 = vmatpush2.xpose.msra.mxu0 0.0
        %582 = vmatprep.subr.mxu0 0.0
        %583 = vmatpush2.xpose.msra.mxu0 0.0
        %584 = vmatprep.subr.mxu0 0.0
        %585 = vmatpush2.xpose.msra.mxu0 0.0
        %586 = vmatprep.subr.mxu0 0.0
        %587 = vmatpush2.xpose.msra.mxu0 0.0
        %588 = vmatprep.subr.mxu0 0.0
        %589 = vmatpush2.xpose.msra.mxu0 0.0
        %590 = vmatprep.subr.mxu0 0.0
        %591 = vmatpush2.xpose.msra.mxu0 0.0
        %592 = vmatprep.mubr.f32.mxu0 %v494
        %593 = vmatmul.mubr.f32.gmra.mxu0 %v493
        %v594 = vpop.f32.mrf.mxu0
        %v595 = vadd.f32 0.0, %v594
        %v596 = vpop.f32.mrf.mxu0
        %597 = vdwg.mxu0
        %v598 = vadd.f32 %v495, %v595
        %599 = vst [vmem:[#allocation2] sm:$0xff] %v598
        // Predicated region
        $region65: #{tpu_custom_call.1} parent=47 // pred_check
          %p600 = pneg %p372
        $region66: #{tpu_custom_call.1} parent=47 // pred_check_branch
          %602 = sbr.rel (%p600) target = $region68
        $region67: #{tpu_custom_call.1} parent=47 // pred_region
          %v603 = vld [vmem:[#allocation2] sm:$0xff]
          %v604 = vld [vmem:[%s4] sm:$0x1]
          %v606 = vlaneseq
          %v607 = vshrl.u32 %v606, 7
          %v608 = vsub.s32 0, %v607
          %v609 = vrot.slane %v604, %v608
          %v611 = vadd.f32 %v603, %v609
          %v612 = vadd.f32 %v611, %v377
          %613 = vadd.xlane.f32.xlu0 %v612
          %v614 = vpop.xlane.xlu0 %613
          %v615 = vmul.f32 %v614, 0.0078125
          %v616 = vmul.f32 %v612, %v612
          %617 = vadd.xlane.f32.xlu0 %v616
          %v618 = vpop.xlane.xlu0 %617
          %v619 = vmul.f32 %v618, 0.0078125
          %v620 = vmul.f32 %v615, %v615
          %v621 = vsub.f32 %v619, %v620
          %v622 = vmax.f32 %v621, 0.0
          %v623 = vsub.f32 %v612, %v615
          %v624 = vadd.f32 %v622, 1e-05
          %v625 = vrsqrt.pop %v624
          %v626 = vmul.f32 %v623, %v625
          %v627 = vld [vmem:[%s5] sm:$0x1]
          %v629 = vlaneseq
          %v630 = vshrl.u32 %v629, 7
          %v631 = vsub.s32 0, %v630
          %v632 = vrot.slane %v627, %v631
          %v634 = vmul.f32 %v626, %v632
          %v635 = vld [vmem:[%s6] sm:$0x1]
          %v637 = vlaneseq
          %v638 = vshrl.u32 %v637, 7
          %v639 = vsub.s32 0, %v638
          %v640 = vrot.slane %v635, %v639
          %v642 = vadd.f32 %v634, %v640
          %643 = vst [vmem:[%s364] sm:$0xff] %v642
        $region68: #{tpu_custom_call.1} parent=47 // pred_fallthru
          _
        %s644 = sand.u32 %s212, 1
        %s645 = scalar_lea.sflag [#allocation5], %s644
        %s646 = sand.u32 %s212, 1
        %s647 = smul.addr %s646, 8
        %s648 = scalar_lea.vmem [#allocation9], %s647
        // Predicated region
        $region69: #{tpu_custom_call.1} parent=47 // pred_check
          %p649 = pneg %p222
        $region70: #{tpu_custom_call.1} parent=47 // pred_check_branch
          %651 = sbr.rel (%p649) target = $region72
        $region71: #{tpu_custom_call.1} parent=47 // pred_region
          %s653 = ssub.s32 128, 128
          %654 = vsyncadd %s645, %s653
          %s655 = smul.addr %s29, 128
          %s656 = scalar_lea.hbm %s7, %s655
          %s658 = sshll.u32 %s648, 4
          %s659 = int_to_ptr.vmem [resolvable:$true] %s658
          %661 = dma.vmem_to_hbm [thread:$0]  %s659, 128, %s656, %s645
        $region72: #{tpu_custom_call.1} parent=47 // pred_fallthru
          _
      $region48: #{tpu_custom_call.1} parent=5 // pred_fallthru
        _
      %p662 = scmp.le.s32.totalorder 2, %s20
      // Predicated region
      $region73: #{tpu_custom_call.1} parent=5 // pred_check
        %p663 = pneg %p662
      $region74: #{tpu_custom_call.1} parent=5 // pred_check_branch
        %665 = sbr.rel (%p663) target = $region76
      $region75: #{tpu_custom_call.1} parent=5 // pred_region
        %s666 = ssub.s32 %s20, 2
        // Predicated region
        $region77: #{tpu_custom_call.1} parent=75 // pred_check
          %p667 = pneg %p228
        $region78: #{tpu_custom_call.1} parent=75 // pred_check_branch
          %669 = sbr.rel (%p667) target = $region80
        $region79: #{tpu_custom_call.1} parent=75 // pred_region
          %s670 = sand.u32 %s213, 1
          %s671 = scalar_lea.sflag [#allocation5], %s670
          %s672 = sand.u32 %s213, 1
          %s673 = smul.addr %s672, 8
          %s674 = scalar_lea.vmem [#allocation9], %s673
          %675 = dma.done %s671, 128
        $region80: #{tpu_custom_call.1} parent=75 // pred_fallthru
          _
      $region76: #{tpu_custom_call.1} parent=5 // pred_fallthru
        _
    $region6: #{tpu_custom_call.1} parent=1 // loop_footer
      %s24 = sadd.s32 1, %s20
    $region7: #{tpu_custom_call.1} parent=1 // loop_footer_branch
      %19 = sbr.rel target = $region3
    $region8: #{tpu_custom_call.1} parent=1 // loop_exit
      _
    %676 = vsyncpa [#allocation4], 1
    %s677 = scalar_lea.sflag [#allocation4], 1
    %678 = vsyncpa %s677, 1
    %679 = vsyncpa [#allocation7], 1
    %680 = vsyncpa [#allocation5], 1
    %s681 = scalar_lea.sflag [#allocation5], 1
    %682 = vsyncpa %s681, 1

</llo_original>
